<compile_context>
chip_gen: v7x
topology: tpu7x:2x2x1
jax: 0.10.0
libtpu: 0.0.40
codegen_flags: <defaults>
</compile_context>

<pallas_src>
import functools

import numpy as np
import jax
import jax.numpy as jnp
from jax.experimental import pallas as pl
from jax.experimental.pallas import tpu as pltpu


# --------------------------------------------------------------------------
# small helpers
# --------------------------------------------------------------------------

def _round_up(x, m):
    return (x + m - 1) // m * m


def _vmem_limit(block_bytes):
    # computed scoped-VMEM budget: 2x (double buffering) + headroom, capped so
    # it is always legal on v7x's 64 MiB physical VMEM.
    return int(min(max(2 * block_bytes + (4 << 20), 16 << 20), 48 << 20))


def _sig(t):
    return 1.0 / (1.0 + jnp.exp(-t))


def _lanes(flat, fill=0.0):
    """1-D (T,) -> lane-dense (Mp, 128), zero/fill padded to a (8,128) multiple."""
    T = flat.shape[0]
    pad = (-T) % 1024
    if pad:
        flat = jnp.pad(flat, (0, pad), constant_values=fill)
    return flat.reshape(-1, 128)


def _row_tile(M, cap=1024):
    t = min(M, cap)
    while M % t:
        t -= 8
    return t


# --------------------------------------------------------------------------
# Pallas kernel 1: tiled matmul + bias (+ ReLU), bf16 MXU, f32 accumulator.
# Used for every 1x1 conv (as a pure GEMM).
# --------------------------------------------------------------------------

def _mm_bias_kernel(a_ref, w_ref, b_ref, o_ref, acc_ref, *, relu):
    @pl.when(pl.program_id(1) == 0)
    def _():
        acc_ref[...] = jnp.zeros_like(acc_ref)

    acc_ref[...] += jnp.dot(a_ref[...], w_ref[...],
                            preferred_element_type=jnp.float32)

    @pl.when(pl.program_id(1) == pl.num_programs(1) - 1)
    def _():
        r = acc_ref[...] + b_ref[...]
        if relu:
            r = jnp.maximum(r, 0.0)
        o_ref[...] = r.astype(o_ref.dtype)


def _pick_m_tile(M):
    for t in (1024, 512, 256, 128):
        if M >= t and M % t == 0:
            return t
    if M <= 1024:
        return _round_up(M, 8)
    return 512


@functools.partial(jax.jit, static_argnames=("relu",))
def matmul_bias(a, w, b, relu=False):
    """(M,K) @ (K,N) + bias, optional fused ReLU."""
    M, K = a.shape
    N = w.shape[1]
    TM = _pick_m_tile(M)
    Mp = _round_up(M, TM)
    TK = K if K <= 1024 else 512
    Kp = _round_up(K, TK)

    a16 = a.astype(jnp.bfloat16)
    w16 = w.astype(jnp.bfloat16)
    if Mp != M or Kp != K:
        a16 = jnp.pad(a16, ((0, Mp - M), (0, Kp - K)))
    if Kp != K:
        w16 = jnp.pad(w16, ((0, Kp - K), (0, 0)))

    block_bytes = (TM * TK * 2 + TK * N * 2 + N * 4 + 2 * TM * N * 4)
    out = pl.pallas_call(
        functools.partial(_mm_bias_kernel, relu=relu),
        out_shape=jax.ShapeDtypeStruct((Mp, N), jnp.float32),
        grid=(Mp // TM, Kp // TK),
        in_specs=[pl.BlockSpec((TM, TK), lambda i, k: (i, k)),
                  pl.BlockSpec((TK, N), lambda i, k: (k, 0)),
                  pl.BlockSpec((1, N), lambda i, k: (0, 0))],
        out_specs=pl.BlockSpec((TM, N), lambda i, k: (i, 0)),
        scratch_shapes=[pltpu.VMEM((TM, N), jnp.float32)],
        compiler_params=pltpu.CompilerParams(
            dimension_semantics=("parallel", "arbitrary"),
            vmem_limit_bytes=_vmem_limit(block_bytes)),
    )(a16, w16, b.reshape(1, N).astype(jnp.float32))
    return out[:M] if Mp != M else out


# --------------------------------------------------------------------------
# Pallas kernel 2: fused 3x3 'same' conv (stride 1), NHWC.
# The padded image is kept flat (row-major over the padded width grid) so the
# 9 taps are static row-shifted matmuls accumulated in registers; optional
# residual-add + ReLU epilogue (used to fuse the FTB skip connection).
# --------------------------------------------------------------------------

def _conv3x3_kernel(*refs, Wp, relu, has_res):
    if has_res:
        x_ref, hal_ref, w_ref, b_ref, res_ref, o_ref = refs
    else:
        x_ref, hal_ref, w_ref, b_ref, o_ref = refs
        res_ref = None
    rows = o_ref.shape[0]                                    # TH * Wp
    band = jnp.concatenate([x_ref[...], hal_ref[...]], axis=0)
    acc = None
    for dy in range(3):
        for dx in range(3):
            off = dy * Wp + dx
            tap = jnp.dot(band[off:off + rows, :], w_ref[dy * 3 + dx],
                          preferred_element_type=jnp.float32)
            acc = tap if acc is None else acc + tap
    acc = acc + b_ref[...]
    if res_ref is not None:
        acc = acc + res_ref[...]
    if relu:
        acc = jnp.maximum(acc, 0.0)
    o_ref[...] = acc.astype(o_ref.dtype)


@functools.partial(jax.jit, static_argnames=("relu",))
def conv3x3(x, w, b, res=None, relu=False):
    """Fused 3x3 conv, NHWC, optional fused residual add + ReLU epilogue."""
    N, H, W, Cin = x.shape
    Cout = w.shape[-1]
    Wp = _round_up(W + 2, 8)             # padded width grid (keeps rows 8-aligned)

    TH = H
    while TH > 8 and TH % 2 == 0 and TH * Wp * Cin * 2 > (2 << 20):
        TH //= 2
    nT = H // TH
    rows = TH * Wp

    x16 = x.astype(jnp.bfloat16)
    # 1 top / 2 bottom pad rows (bottom over-pad covers the flat tap over-read),
    # 1 left pad col, remaining right pad cols.
    xp = jnp.pad(x16, ((0, 0), (1, 2), (1, Wp - W - 1), (0, 0)))
    xflat = xp.reshape(N, (H + 3) * Wp, Cin)
    hal = jnp.stack([xp[:, (i + 1) * TH:(i + 1) * TH + 3]
                     for i in range(nT)], axis=1).reshape(N, nT, 3 * Wp, Cin)
    w9 = w.reshape(9, Cin, Cout).astype(jnp.bfloat16)
    b2 = b.reshape(1, Cout).astype(jnp.float32)

    in_specs = [pl.BlockSpec((None, rows, Cin), lambda n, i: (n, i, 0)),
                pl.BlockSpec((None, None, 3 * Wp, Cin), lambda n, i: (n, i, 0, 0)),
                pl.BlockSpec((9, Cin, Cout), lambda n, i: (0, 0, 0)),
                pl.BlockSpec((1, Cout), lambda n, i: (0, 0))]
    args = [xflat, hal, w9, b2]
    has_res = res is not None
    if has_res:
        resp = jnp.pad(res.astype(jnp.float32),
                       ((0, 0), (0, 0), (0, Wp - W), (0, 0)))
        args.append(resp.reshape(N, H * Wp, Cout))
        in_specs.append(pl.BlockSpec((None, rows, Cout), lambda n, i: (n, i, 0)))

    block_bytes = (rows * Cin * 2 + 3 * Wp * Cin * 2 + 9 * Cin * Cout * 2
                   + Cout * 4 + rows * Cout * 4
                   + (rows * Cout * 4 if has_res else 0))
    out = pl.pallas_call(
        functools.partial(_conv3x3_kernel, Wp=Wp, relu=relu, has_res=has_res),
        out_shape=jax.ShapeDtypeStruct((N, H * Wp, Cout), jnp.float32),
        grid=(N, nT),
        in_specs=in_specs,
        out_specs=pl.BlockSpec((None, rows, Cout), lambda n, i: (n, i, 0)),
        compiler_params=pltpu.CompilerParams(
            dimension_semantics=("parallel", "parallel"),
            vmem_limit_bytes=_vmem_limit(block_bytes)),
    )(*args)
    return out.reshape(N, H, Wp, Cout)[:, :, :W, :]


# --------------------------------------------------------------------------
# Pallas kernels 3: lane-dense elementwise heads (PQRS, offset, depth blend).
# --------------------------------------------------------------------------

# TODO(synk): parameterized_disparity / pqrs2depth sources are not in the
# provided module; the plane formula follows the P3Depth PQRS convention
# (sigmoid-activated P,Q,R,S; disparity squashed to (1/max_depth, 1]) and the
# same map is shared by both so they stay mutually consistent.
def _param_disp_kernel(x_ref, uv_ref, p_ref, q_ref, r_ref, s_ref, d_ref,
                       *, inv_maxd):
    p = _sig(x_ref[0]) * 2.0 - 1.0
    q = _sig(x_ref[1]) * 2.0 - 1.0
    r = _sig(x_ref[2]) * 2.0 - 1.0
    s = _sig(x_ref[3])
    plane = p * uv_ref[0] + q * uv_ref[1] + r
    d_ref[...] = inv_maxd + (1.0 - inv_maxd) * _sig(s * plane)
    p_ref[...] = p
    q_ref[...] = q
    r_ref[...] = r
    s_ref[...] = s


def _pqrs2disp_kernel(x_ref, uv_ref, d_ref, *, inv_maxd):
    p, q, r, s = x_ref[0], x_ref[1], x_ref[2], x_ref[3]
    plane = p * uv_ref[0] + q * uv_ref[1] + r
    d_ref[...] = inv_maxd + (1.0 - inv_maxd) * _sig(s * plane)


def _offset_head_kernel(x_ref, seed_ref, ou_ref, ov_ref, *, thr):
    seed_ref[...] = _sig(x_ref[0])
    ou_ref[...] = jnp.tanh(x_ref[1]) * thr
    ov_ref[...] = jnp.tanh(x_ref[2]) * thr


def _depth_blend_kernel(d1_ref, doff_ref, c_ref,
                        di_ref, do_ref, df_ref, dispf_ref):
    depth_init = 1.0 / d1_ref[...]
    depth_off = 1.0 / doff_ref[...]
    c = c_ref[...]
    depth_final = (1.0 - c) * depth_init + c * depth_off
    di_ref[...] = depth_init
    do_ref[...] = depth_off
    df_ref[...] = depth_final
    dispf_ref[...] = 1.0 / depth_final


@functools.partial(jax.jit, static_argnames=("max_depth",))
def parameterized_disparity(x_nchw, coords, max_depth):
    N, _, H, W = x_nchw.shape
    T = N * H * W
    xs = jnp.stack([_lanes(x_nchw[:, c].reshape(-1)) for c in range(4)])
    uv = jnp.stack([_lanes(coords[..., 0].reshape(-1)),
                    _lanes(coords[..., 1].reshape(-1))])
    Mp = xs.shape[1]
    TB = _row_tile(Mp)
    outs = pl.pallas_call(
        functools.partial(_param_disp_kernel, inv_maxd=1.0 / max_depth),
        out_shape=tuple(jax.ShapeDtypeStruct((Mp, 128), jnp.float32)
                        for _ in range(5)),
        grid=(Mp // TB,),
        in_specs=[pl.BlockSpec((4, TB, 128), lambda i: (0, i, 0)),
                  pl.BlockSpec((2, TB, 128), lambda i: (0, i, 0))],
        out_specs=tuple(pl.BlockSpec((TB, 128), lambda i: (i, 0))
                        for _ in range(5)),
        compiler_params=pltpu.CompilerParams(
            dimension_semantics=("parallel",)),
    )(xs, uv)
    return tuple(o.reshape(-1)[:T].reshape(N, 1, H, W) for o in outs)


@functools.partial(jax.jit, static_argnames=("max_depth",))
def pqrs2depth(x_nchw, coords, max_depth):
    N, _, H, W = x_nchw.shape
    T = N * H * W
    xs = jnp.stack([_lanes(x_nchw[:, c].reshape(-1)) for c in range(4)])
    uv = jnp.stack([_lanes(coords[..., 0].reshape(-1)),
                    _lanes(coords[..., 1].reshape(-1))])
    Mp = xs.shape[1]
    TB = _row_tile(Mp)
    d = pl.pallas_call(
        functools.partial(_pqrs2disp_kernel, inv_maxd=1.0 / max_depth),
        out_shape=jax.ShapeDtypeStruct((Mp, 128), jnp.float32),
        grid=(Mp // TB,),
        in_specs=[pl.BlockSpec((4, TB, 128), lambda i: (0, i, 0)),
                  pl.BlockSpec((2, TB, 128), lambda i: (0, i, 0))],
        out_specs=pl.BlockSpec((TB, 128), lambda i: (i, 0)),
        compiler_params=pltpu.CompilerParams(
            dimension_semantics=("parallel",)),
    )(xs, uv)
    return d.reshape(-1)[:T].reshape(N, 1, H, W)


@functools.partial(jax.jit, static_argnames=("thr",))
def offset_head(of1_nhwc, thr):
    # channel 0 -> seed (sigmoid); channels 1,2 -> offset (tanh * thr);
    # channel 3 intentionally unused (matches the PyTorch reference).
    N, H, W, _ = of1_nhwc.shape
    T = N * H * W
    planes = jnp.transpose(of1_nhwc, (3, 0, 1, 2)).reshape(4, -1)
    xs = jnp.stack([_lanes(planes[c]) for c in range(3)])
    Mp = xs.shape[1]
    TB = _row_tile(Mp)
    seed, ou, ov = pl.pallas_call(
        functools.partial(_offset_head_kernel, thr=thr),
        out_shape=tuple(jax.ShapeDtypeStruct((Mp, 128), jnp.float32)
                        for _ in range(3)),
        grid=(Mp // TB,),
        in_specs=[pl.BlockSpec((3, TB, 128), lambda i: (0, i, 0))],
        out_specs=tuple(pl.BlockSpec((TB, 128), lambda i: (i, 0))
                        for _ in range(3)),
        compiler_params=pltpu.CompilerParams(
            dimension_semantics=("parallel",)),
    )(xs)
    unflat = lambda o: o.reshape(-1)[:T].reshape(N, H, W)
    seed = unflat(seed)[:, None]                               # (N,1,H,W)
    off = jnp.stack([unflat(ou), unflat(ov)], axis=1)          # (N,2,H,W)
    return seed, off


@jax.jit
def depth_blend(disp1, disp_offset, conf):
    N, _, H, W = disp1.shape
    T = N * H * W
    d1 = _lanes(disp1.reshape(-1), 1.0)
    do = _lanes(disp_offset.reshape(-1), 1.0)
    cf = _lanes(conf.reshape(-1), 0.0)
    Mp = d1.shape[0]
    TB = _row_tile(Mp)
    spec = pl.BlockSpec((TB, 128), lambda i: (i, 0))
    outs = pl.pallas_call(
        _depth_blend_kernel,
        out_shape=tuple(jax.ShapeDtypeStruct((Mp, 128), jnp.float32)
                        for _ in range(4)),
        grid=(Mp // TB,),
        in_specs=[spec, spec, spec],
        out_specs=tuple(pl.BlockSpec((TB, 128), lambda i: (i, 0))
                        for _ in range(4)),
        compiler_params=pltpu.CompilerParams(
            dimension_semantics=("parallel",)),
    )(d1, do, cf)
    return tuple(o.reshape(-1)[:T].reshape(N, 1, H, W) for o in outs)


# --------------------------------------------------------------------------
# JAX glue: conv dispatcher, bilinear upsample (matmul form), grid_sample,
# coords, space_to_depth.
# --------------------------------------------------------------------------

def conv2d(x, p, relu=False, residual=None):
    w, b = p["w"], p["b"]
    kh, kw, cin, cout = w.shape
    N, H, W, _ = x.shape
    if kh == 1 and kw == 1:
        y = matmul_bias(x.reshape(N * H * W, cin), w.reshape(cin, cout), b,
                        relu=relu).reshape(N, H, W, cout)
        if residual is not None:
            y = jnp.maximum(y + residual, 0.0)
        return y
    return conv3x3(x, w, b, res=residual, relu=relu)


def _interp_matrix(out_len, in_len):
    m = np.zeros((out_len, in_len), np.float32)
    if in_len == 1:
        m[:, 0] = 1.0
        return m
    if out_len > 1:
        s = np.arange(out_len, dtype=np.float64) * ((in_len - 1) / (out_len - 1))
    else:
        s = np.zeros((out_len,), np.float64)
    i0 = np.clip(np.floor(s).astype(np.int64), 0, in_len - 1)
    i1 = np.clip(i0 + 1, 0, in_len - 1)
    w1 = (s - i0).astype(np.float32)
    m[np.arange(out_len), i0] += 1.0 - w1
    m[np.arange(out_len), i1] += w1
    return m


def upsample_bilinear(x, factor):
    """nn.Upsample(scale_factor, mode='bilinear', align_corners=True), NHWC,
    expressed as two small dense interpolation matmuls (no gathers)."""
    N, H, W, C = x.shape
    Mh = jnp.asarray(_interp_matrix(H * factor, H))
    Mw = jnp.asarray(_interp_matrix(W * factor, W))
    y = jnp.einsum('oh,nhwc->nowc', Mh, x)
    return jnp.einsum('pw,nowc->nopc', Mw, y)


# TODO(synk): F.grid_sample is a data-dependent bilinear gather; kept in plain
# JAX (a Pallas version would need a manual DMA gather).
def grid_sample(img_nchw, grid, padding_mode):
    N, C, H, W = img_nchw.shape
    imgc = jnp.transpose(img_nchw, (0, 2, 3, 1))
    gx, gy = grid[..., 0], grid[..., 1]
    ix = (gx + 1.0) * 0.5 * (W - 1)
    iy = (gy + 1.0) * 0.5 * (H - 1)
    ix0 = jnp.floor(ix)
    iy0 = jnp.floor(iy)
    wx1 = ix - ix0
    wx0 = 1.0 - wx1
    wy1 = iy - iy0
    wy0 = 1.0 - wy1
    b = jnp.arange(N)[:, None, None]

    def corner(iyf, ixf, wy, wx):
        if padding_mode == "zeros":
            valid = ((iyf >= 0) & (iyf <= H - 1) & (ixf >= 0) & (ixf <= W - 1))
            wgt = wy * wx * valid.astype(jnp.float32)
        else:  # 'border'
            wgt = wy * wx
        iyc = jnp.clip(iyf.astype(jnp.int32), 0, H - 1)
        ixc = jnp.clip(ixf.astype(jnp.int32), 0, W - 1)
        return imgc[b, iyc, ixc, :] * wgt[..., None]

    out = (corner(iy0, ix0, wy0, wx0) + corner(iy0, ix0 + 1, wy0, wx1)
           + corner(iy0 + 1, ix0, wy1, wx0) + corner(iy0 + 1, ix0 + 1, wy1, wx1))
    return jnp.transpose(out, (0, 3, 1, 2))


def get_coords(b, h, w):
    """get_coords(..., fix_axis=True): normalized [-1,1] coords, (B,H,W,2)=(u,v)."""
    u = (jnp.arange(w, dtype=jnp.float32) - (w - 1) / 2.0) / ((w - 1) / 2.0)
    v = (jnp.arange(h, dtype=jnp.float32) - (h - 1) / 2.0) / ((h - 1) / 2.0)
    U = jnp.broadcast_to(u[None, :], (h, w))
    V = jnp.broadcast_to(v[:, None], (h, w))
    coords = jnp.stack([U, V], axis=2)
    return jnp.broadcast_to(coords[None], (b, h, w, 2))


def space_to_depth(x, f):
    N, H, W, C = x.shape
    x = x.reshape(N, H // f, f, W // f, f, C)
    x = jnp.transpose(x, (0, 1, 3, 2, 4, 5))
    return x.reshape(N, H // f, W // f, C * f * f)


# --------------------------------------------------------------------------
# Deterministic parameter construction (synthetic weights, no checkpoints).
# --------------------------------------------------------------------------

def _conv_init(key, kh, kw, cin, cout):
    kw_, kb = jax.random.split(key)
    w = jax.random.normal(kw_, (kh, kw, cin, cout), jnp.float32) / jnp.sqrt(kh * kw * cin)
    b = 0.01 * jax.random.normal(kb, (cout,), jnp.float32)
    return {"w": w, "b": b}


def _fold_bn(conv, c, eps=1e-5):
    # eval-mode BatchNorm with default params (gamma=1, beta=0, mean=0, var=1)
    gamma = jnp.ones((c,), jnp.float32)
    beta = jnp.zeros((c,), jnp.float32)
    mean = jnp.zeros((c,), jnp.float32)
    var = jnp.ones((c,), jnp.float32)
    scale = gamma / jnp.sqrt(var + eps)
    return {"w": conv["w"] * scale, "b": (conv["b"] - mean) * scale + beta}


def _ftb_init(key, cin, cmid):
    k = jax.random.split(key, 3)
    return {"conv1": _conv_init(k[0], 1, 1, cin, cmid),
            "convb1": _fold_bn(_conv_init(k[1], 3, 3, cmid, cmid), cmid),
            "convb2": _conv_init(k[2], 3, 3, cmid, cmid)}


def _ffm_init(key, cin, cmid, cout):
    k = jax.random.split(key, 2)
    return {"ftb1": _ftb_init(k[0], cin, cmid), "ftb2": _ftb_init(k[1], cmid, cout)}


def _ao_init(key, cin, cout):
    k = jax.random.split(key, 2)
    return {"conv1": _fold_bn(_conv_init(k[0], 3, 3, cin, cin // 2), cin // 2),
            "conv2": _conv_init(k[1], 3, 3, cin // 2, cout)}


def encoder_init(key, inchannels):
    # TODO(synk): the ResNet-50 backbone source was not provided; a
    # deterministic space-to-depth + 1x1-conv pyramid with the same channel
    # counts & strides (/4, /8, /16, /32) stands in for it.
    k = jax.random.split(key, 4)
    params = []
    c_prev = 3 * 16
    for i, c in enumerate(inchannels):
        params.append(_conv_init(k[i], 1, 1, c_prev, c))
        c_prev = c * 4
    return params


def decoder_init(key, inchannels, midchannels, outchannels=4):
    k = jax.random.split(key, 10)
    return {
        "conv": _ftb_init(k[0], inchannels[3], midchannels[3]),
        "conv1": _conv_init(k[1], 3, 3, midchannels[3], midchannels[2]),
        "ffm2_depth": _ffm_init(k[2], inchannels[2], midchannels[2], midchannels[2]),
        "ffm1_depth": _ffm_init(k[3], inchannels[1], midchannels[1], midchannels[1]),
        "ffm0_depth": _ffm_init(k[4], inchannels[0], midchannels[0], midchannels[0]),
        "outconv_depth": _ao_init(k[5], inchannels[0], outchannels),
        "ffm2_offset": _ffm_init(k[6], inchannels[2], midchannels[2], midchannels[2]),
        "ffm1_offset": _ffm_init(k[7], inchannels[1], midchannels[1], midchannels[1]),
        "ffm0_offset": _ffm_init(k[8], inchannels[0], midchannels[0], midchannels[0]),
        "outconv_offset": _ao_init(k[9], inchannels[0], 4),
    }


# --------------------------------------------------------------------------
# Module forward passes (NHWC compute, PyTorch-layout outputs dict).
# --------------------------------------------------------------------------

def ftb_forward(p, x, y=None):
    if y is None:
        y = conv2d(x, p["conv1"], relu=False)           # 1x1
    t = jnp.maximum(y, 0.0)                             # branch input ReLU
    t = conv2d(t, p["convb1"], relu=True)               # 3x3 + folded BN + ReLU
    # convb2 3x3 with fused residual-add + ReLU epilogue (relu(conv(t)+y))
    return conv2d(t, p["convb2"], relu=True, residual=y)


def ffm_forward(p, low, high, upfactor, y1=None):
    x = ftb_forward(p["ftb1"], low, y=y1)
    x = x + high
    x = ftb_forward(p["ftb2"], x)
    return upsample_bilinear(x, upfactor)


def ao_forward(p, x, upfactor=2):
    x = conv2d(x, p["conv1"], relu=True)
    x = conv2d(x, p["conv2"], relu=False)
    return upsample_bilinear(x, upfactor)


def _merged_ftb1_conv1(p_d, p_o, low):
    """Run the paired depth/offset ftb1 1x1 convs on the shared feature map as
    one matmul (doubles the matmul N, halves reads of the shared activation)."""
    wd, bd = p_d["ftb1"]["conv1"]["w"], p_d["ftb1"]["conv1"]["b"]
    wo, bo = p_o["ftb1"]["conv1"]["w"], p_o["ftb1"]["conv1"]["b"]
    w = jnp.concatenate([wd, wo], axis=-1)
    b = jnp.concatenate([bd, bo], axis=-1)
    y = conv2d(low, {"w": w, "b": b}, relu=False)
    c = wd.shape[-1]
    return y[..., :c], y[..., c:]


def encoder_forward(params, x_nhwc):
    feats = []
    f = space_to_depth(x_nhwc, 4)
    for i, p in enumerate(params):
        f = conv2d(f, p, relu=True)
        feats.append(f)
        if i < 3:
            f = space_to_depth(f, 2)
    return feats


def decoder_forward(p, cfg, feats):
    out = {}
    nchw = lambda t: jnp.transpose(t, (0, 3, 1, 2))
    bott = ftb_forward(p["conv"], feats[3])
    bott = conv2d(bott, p["conv1"], relu=False)
    bott = upsample_bilinear(bott, 2)

    yd4, yo4 = _merged_ftb1_conv1(p["ffm2_depth"], p["ffm2_offset"], feats[2])
    yd3, yo3 = _merged_ftb1_conv1(p["ffm1_depth"], p["ffm1_offset"], feats[1])
    yd2, yo2 = _merged_ftb1_conv1(p["ffm0_depth"], p["ffm0_offset"], feats[0])

    df4 = ffm_forward(p["ffm2_depth"], feats[2], bott, 2, y1=yd4)
    df3 = ffm_forward(p["ffm1_depth"], feats[1], df4, 2, y1=yd3)
    df2 = ffm_forward(p["ffm0_depth"], feats[0], df3, 2, y1=yd2)
    out[("depth_feat", 4)] = nchw(df4)
    out[("depth_feat", 3)] = nchw(df3)
    out[("depth_feat", 2)] = nchw(df2)

    # offset branch (MODEL.OFFSET = True)
    of4 = ffm_forward(p["ffm2_offset"], feats[2], bott, 2, y1=yo4)
    of3 = ffm_forward(p["ffm1_offset"], feats[1], of4, 2, y1=yo3)
    of2 = ffm_forward(p["ffm0_offset"], feats[0], of3, 2, y1=yo2)
    of1 = ao_forward(p["outconv_offset"], of2, 2)        # (N,H,W,4)
    out[("offset_feat", 4)] = nchw(of4)
    out[("offset_feat", 3)] = nchw(of3)
    out[("offset_feat", 2)] = nchw(of2)
    out[("offset_feat", 1)] = nchw(of1)

    seed, off = offset_head(of1, cfg["offset_threshold"])
    out[("seed_map", 1)] = seed                          # (N,1,H,W)
    out[("offset", 1)] = off                             # (N,2,H,W)
    out[("depth_feat", 1)] = nchw(ao_forward(p["outconv_depth"], df2, 2))
    return out


def struct_rank_net_pqrs_forward(params, cfg, x_nchw, epoch=10):
    x = jnp.transpose(x_nchw, (0, 2, 3, 1)).astype(jnp.float32)   # NCHW -> NHWC
    feats = encoder_forward(params["encoder"], x)
    outputs = decoder_forward(params["decoder"], cfg, feats)

    max_depth = cfg["max_depth"]
    depth_feat1 = outputs[("depth_feat", 1)]
    N, _, H, W = depth_feat1.shape
    coords = get_coords(N, H, W)

    # MODEL.PQRS = True
    p1, q1, r1, s1, disp1 = parameterized_disparity(depth_feat1, coords, max_depth)
    outputs[("P", 1)] = p1
    outputs[("Q", 1)] = q1
    outputs[("R", 1)] = r1
    outputs[("S", 1)] = s1
    outputs[("disp_init", 1)] = disp1
    outputs[("depth_init", 1)] = 1.0 / disp1
    outputs[("depth_final", 1)] = 1.0 / disp1

    # ---- MODEL.OFFSET branch ----
    offset = outputs[("offset", 1)]                      # (N,2,H,W)
    offset = jnp.transpose(offset, (0, 2, 3, 1))         # (N,H,W,2)
    ocoords = jnp.clip(coords + offset, -1.0, 1.0)
    outputs[("offset", 1)] = offset
    outputs[("ocoords", 1)] = ocoords

    for _ in range(cfg["iterative_refinement"]):
        du = offset[..., 0][:, None]                     # (N,1,H,W)
        dv = offset[..., 1][:, None]
        du = du + grid_sample(du, ocoords, "zeros")
        dv = dv + grid_sample(dv, ocoords, "zeros")
        offset = jnp.concatenate([du, dv], axis=1)
        offset = jnp.transpose(offset, (0, 2, 3, 1))
        ocoords = jnp.clip(coords + offset, -1.0, 1.0)
    outputs[("offset_refined", 1)] = offset
    outputs[("ocoords_refined", 1)] = ocoords

    outputs[("seed_map_offset", 1)] = grid_sample(outputs[("seed_map", 1)], ocoords, "zeros")
    p_o = grid_sample(p1, ocoords, "border")
    q_o = grid_sample(q1, ocoords, "border")
    r_o = grid_sample(r1, ocoords, "border")
    s_o = grid_sample(s1, ocoords, "border")
    outputs[("P_offset", 1)] = p_o
    outputs[("Q_offset", 1)] = q_o
    outputs[("R_offset", 1)] = r_o
    outputs[("S_offset", 1)] = s_o
    disp_offset = pqrs2depth(jnp.concatenate([p_o, q_o, r_o, s_o], axis=1),
                             coords, max_depth)
    outputs[("disp_offset", 1)] = disp_offset

    # USE_CONFIDENCE == 1  ->  confidence map = seed map
    conf = outputs[("seed_map", 1)]
    depth_init, depth_offset, depth_final, disp_final = depth_blend(
        disp1, disp_offset, conf)
    outputs[("depth_init", 1)] = depth_init
    outputs[("depth_offset", 1)] = depth_offset
    outputs[("depth_final", 1)] = depth_final
    outputs[("disp_final", 1)] = disp_final
    return outputs


# --------------------------------------------------------------------------
# Demo
# --------------------------------------------------------------------------

CFG = dict(
    backbone="resnet50",
    # reference widths are (256,512,1024,2048)/(256,256,256,512); scaled for demo
    inchannels=(32, 64, 128, 256),
    midchannels=(32, 32, 32, 64),
    outchannels=4,
    max_depth=80.0,
    offset_threshold=0.5,
    iterative_refinement=1,
    use_confidence=1,
    multiscale_adjustment=False,
)


if __name__ == "__main__":
    key = jax.random.PRNGKey(0)
    kenc, kdec, kx = jax.random.split(key, 3)
    params = {
        "encoder": encoder_init(kenc, CFG["inchannels"]),
        "decoder": decoder_init(kdec, CFG["inchannels"], CFG["midchannels"],
                                CFG["outchannels"]),
    }
    # input image, NCHW like the PyTorch module
    x = jax.random.normal(kx, (2, 3, 64, 64), jnp.float32)

    fwd = jax.jit(lambda p, inp: struct_rank_net_pqrs_forward(p, CFG, inp))
    outputs = fwd(params, x)
    outputs = jax.block_until_ready(outputs)

    df = outputs[("depth_final", 1)]
    assert df.shape == (2, 1, 64, 64), df.shape
    assert outputs[("P", 1)].shape == (2, 1, 64, 64)
    assert outputs[("offset", 1)].shape == (2, 64, 64, 2)
    assert bool(jnp.all(jnp.isfinite(df)))
    print("KERNEL_OK")
</pallas_src>

<mosaic_0001>
module attributes {stable_mosaic.version = 11 : i64} {
  func.func @_mm_bias_kernel(%arg0: i32, %arg1: i32, %arg2: memref<512x48xbf16, #tpu.memory_space<vmem>>, %arg3: memref<48x32xbf16, #tpu.memory_space<vmem>>, %arg4: memref<1x32xf32, #tpu.memory_space<vmem>>, %arg5: memref<512x32xf32, #tpu.memory_space<vmem>>, %arg6: memref<512x32xf32, #tpu.memory_space<vmem>>) attributes {dimension_semantics = [#tpu.dimension_semantics<parallel>, #tpu.dimension_semantics<arbitrary>], iteration_bounds = array<i64: 1, 1>, scalar_prefetch = 0 : i64, scratch_operands = 1 : i64, tpu.core_type = #tpu.core_type<tc>, window_params = [{transform_indices = @transform_0, window_bounds = array<i64: 512, 48>}, {transform_indices = @transform_1, window_bounds = array<i64: 48, 32>}, {pipeline_mode = #tpu.pipeline_mode<synchronous>, transform_indices = @transform_2, window_bounds = array<i64: 1, 32>}, {transform_indices = @transform_3, window_bounds = array<i64: 512, 32>}]} {
    %c0_i32 = arith.constant 0 : i32
    %0 = arith.cmpi eq, %arg1, %c0_i32 : i32
    %1 = arith.extui %0 : i1 to i32
    %c0_i32_0 = arith.constant 0 : i32
    %2 = arith.cmpi ne, %1, %c0_i32_0 : i32
    scf.if %2 {
      %cst_10 = arith.constant 0.000000e+00 : f32
      %12 = vector.broadcast %cst_10 : f32 to vector<512x32xf32>
      %c0_11 = arith.constant 0 : index
      %c0_12 = arith.constant 0 : index
      %13 = vector.load %arg6[%c0_11, %c0_12] : memref<512x32xf32, #tpu.memory_space<vmem>>, vector<512x32xf32>
      tpu.vector_store %arg6[%c0_11, %c0_12], %12 {strides = array<i32>} : memref<512x32xf32, #tpu.memory_space<vmem>>, vector<512x32xf32>,
    } else {
    }
    %c0 = arith.constant 0 : index
    %c0_1 = arith.constant 0 : index
    %3 = vector.load %arg6[%c0, %c0_1] : memref<512x32xf32, #tpu.memory_space<vmem>>, vector<512x32xf32>
    %c0_2 = arith.constant 0 : index
    %c0_3 = arith.constant 0 : index
    %4 = vector.load %arg2[%c0_2, %c0_3] : memref<512x48xbf16, #tpu.memory_space<vmem>>, vector<512x48xbf16>
    %c0_4 = arith.constant 0 : index
    %c0_5 = arith.constant 0 : index
    %5 = vector.load %arg3[%c0_4, %c0_5] : memref<48x32xbf16, #tpu.memory_space<vmem>>, vector<48x32xbf16>
    %cst = arith.constant dense<0.000000e+00> : vector<512x32xf32>
    %6 = tpu.matmul %4, %5, %cst {dimension_numbers = #tpu.dot_dimension_numbers<[1], [0], [0], [1], [0, 0, 1, 1], [], []>} : vector<512x48xbf16>, vector<48x32xbf16>, vector<512x32xf32> -> vector<512x32xf32>
    %7 = arith.addf %3, %6 : vector<512x32xf32>
    %c0_6 = arith.constant 0 : index
    %c0_7 = arith.constant 0 : index
    %8 = vector.load %arg6[%c0_6, %c0_7] : memref<512x32xf32, #tpu.memory_space<vmem>>, vector<512x32xf32>
    tpu.vector_store %arg6[%c0_6, %c0_7], %7 {strides = array<i32>} : memref<512x32xf32, #tpu.memory_space<vmem>>, vector<512x32xf32>,
    %c0_i32_8 = arith.constant 0 : i32
    %9 = arith.cmpi eq, %arg1, %c0_i32_8 : i32
    %10 = arith.extui %9 : i1 to i32
    %c0_i32_9 = arith.constant 0 : i32
    %11 = arith.cmpi ne, %10, %c0_i32_9 : i32
    scf.if %11 {
      %c0_10 = arith.constant 0 : index
      %c0_11 = arith.constant 0 : index
      %12 = vector.load %arg6[%c0_10, %c0_11] : memref<512x32xf32, #tpu.memory_space<vmem>>, vector<512x32xf32>
      %c0_12 = arith.constant 0 : index
      %c0_13 = arith.constant 0 : index
      %13 = vector.load %arg4[%c0_12, %c0_13] : memref<1x32xf32, #tpu.memory_space<vmem>>, vector<1x32xf32>
      %14 = vector.broadcast %13 : vector<1x32xf32> to vector<512x32xf32>
      %15 = arith.addf %12, %14 : vector<512x32xf32>
      %cst_14 = arith.constant 0.000000e+00 : f32
      %16 = vector.broadcast %cst_14 : f32 to vector<512x32xf32>
      %17 = arith.maximumf %15, %16 : vector<512x32xf32>
      %c0_15 = arith.constant 0 : index
      %c0_16 = arith.constant 0 : index
      %18 = vector.load %arg5[%c0_15, %c0_16] : memref<512x32xf32, #tpu.memory_space<vmem>>, vector<512x32xf32>
      tpu.vector_store %arg5[%c0_15, %c0_16], %17 {strides = array<i32>} : memref<512x32xf32, #tpu.memory_space<vmem>>, vector<512x32xf32>,
    } else {
    }
    return
  }
  func.func @transform_0(%arg0: i32, %arg1: i32) -> (i32, i32) {
    %c0_i32 = arith.constant 0 : i32
    return %arg0, %arg1 : i32, i32
  }
  func.func @transform_1(%arg0: i32, %arg1: i32) -> (i32, i32) {
    %c0_i32 = arith.constant 0 : i32
    %c0_i32_0 = arith.constant 0 : i32
    return %arg1, %c0_i32 : i32, i32
  }
  func.func @transform_2(%arg0: i32, %arg1: i32) -> (i32, i32) {
    %c0_i32 = arith.constant 0 : i32
    %c0_i32_0 = arith.constant 0 : i32
    %c0_i32_1 = arith.constant 0 : i32
    return %c0_i32, %c0_i32_0 : i32, i32
  }
  func.func @transform_3(%arg0: i32, %arg1: i32) -> (i32, i32) {
    %c0_i32 = arith.constant 0 : i32
    %c0_i32_0 = arith.constant 0 : i32
    return %arg0, %c0_i32 : i32, i32
  }
}

</mosaic_0001>

<llo_original>
// kernel: matmul_bias.1
$region0: #{matmul_bias.1}
  #allocation0 [shape = 'u32[]', space=smem, size = 0x4, offset = 0x4, fixed_abs, tag = 'smem constant byte address 0x4 - core index']
  #allocation1 [shape = 'u32[144,128]{1,0:T(1,128)}', space=vmem, size = 0x12000, scoped, tag = 'internal scratch']
  #allocation2 [shape = 'f32[512,32]{1,0:T(8,128)}', space=vmem, size = 0x40000, scoped, tag = 'scratch operand']
  %s0 = inlined_call_operand.vmem [shape: bf16[512,48], index: 0, kind: input, shape index: {}]
  %s1 = inlined_call_operand.vmem [shape: bf16[48,32], index: 1, kind: input, shape index: {}]
  %s2 = inlined_call_operand.vmem [shape: f32[1,32], index: 2, kind: input, shape index: {}]
  %s3 = inlined_call_operand.vmem [shape: f32[512,32], index: 3, kind: output, shape index: {}]
  %s4 = sld [smem:[#allocation0]]
  $region30: #{matmul_bias.1} parent=0
    _
  %s6 = ssub.s32 1, %s4
  %s7 = scalar_select 0, %s6, %s4
  // Predicated region
  $region2: #{matmul_bias.1} parent=0 // pred_check
    _
  $region3: #{matmul_bias.1} parent=0 // pred_check_branch
    %9 = sbr.rel (0) target = $region5
  $region4: #{matmul_bias.1} parent=0 // pred_region
    _
  $region5: #{matmul_bias.1} parent=0 // pred_fallthru
    _
  // Predicated region
  $region6: #{matmul_bias.1} parent=0 // pred_check
    _
  $region7: #{matmul_bias.1} parent=0 // pred_check_branch
    %11 = sbr.rel (0) target = $region9
  $region8: #{matmul_bias.1} parent=0 // pred_region
    _
  $region9: #{matmul_bias.1} parent=0 // pred_fallthru
    _
  // Predicated region
  $region10: #{matmul_bias.1} parent=0 // pred_check
    _
  $region11: #{matmul_bias.1} parent=0 // pred_check_branch
    %13 = sbr.rel (0) target = $region13
  $region12: #{matmul_bias.1} parent=0 // pred_region
    _
  $region13: #{matmul_bias.1} parent=0 // pred_fallthru
    _
  %p15 = scmp.eq.s32.totalorder 0, 0
  // Predicated region
  $region14: #{matmul_bias.1} parent=0 // pred_check
    %p16 = pneg %p15
  $region15: #{matmul_bias.1} parent=0 // pred_check_branch
    %18 = sbr.rel (%p16) target = $region17
  $region16: #{matmul_bias.1} parent=0 // pred_region
    %vm19 = vcmask 261120
    %20 = vst.msk [vmem:[#allocation2] sm:$0xff] %vm19, 0.0
    %21 = vst.msk [vmem:[#allocation2 + $0x8] sm:$0xff] %vm19, 0.0
    %22 = vst.msk [vmem:[#allocation2 + $0x10] sm:$0xff] %vm19, 0.0
    %23 = vst.msk [vmem:[#allocation2 + $0x18] sm:$0xff] %vm19, 0.0
    %24 = vst.msk [vmem:[#allocation2 + $0x20] sm:$0xff] %vm19, 0.0
    %25 = vst.msk [vmem:[#allocation2 + $0x28] sm:$0xff] %vm19, 0.0
    %26 = vst.msk [vmem:[#allocation2 + $0x30] sm:$0xff] %vm19, 0.0
    %27 = vst.msk [vmem:[#allocation2 + $0x38] sm:$0xff] %vm19, 0.0
    %28 = vst.msk [vmem:[#allocation2 + $0x40] sm:$0xff] %vm19, 0.0
    %29 = vst.msk [vmem:[#allocation2 + $0x48] sm:$0xff] %vm19, 0.0
    %30 = vst.msk [vmem:[#allocation2 + $0x50] sm:$0xff] %vm19, 0.0
    %31 = vst.msk [vmem:[#allocation2 + $0x58] sm:$0xff] %vm19, 0.0
    %32 = vst.msk [vmem:[#allocation2 + $0x60] sm:$0xff] %vm19, 0.0
    %33 = vst.msk [vmem:[#allocation2 + $0x68] sm:$0xff] %vm19, 0.0
    %34 = vst.msk [vmem:[#allocation2 + $0x70] sm:$0xff] %vm19, 0.0
    %35 = vst.msk [vmem:[#allocation2 + $0x78] sm:$0xff] %vm19, 0.0
    %36 = vst.msk [vmem:[#allocation2 + $0x80] sm:$0xff] %vm19, 0.0
    %37 = vst.msk [vmem:[#allocation2 + $0x88] sm:$0xff] %vm19, 0.0
    %38 = vst.msk [vmem:[#allocation2 + $0x90] sm:$0xff] %vm19, 0.0
    %39 = vst.msk [vmem:[#allocation2 + $0x98] sm:$0xff] %vm19, 0.0
    %40 = vst.msk [vmem:[#allocation2 + $0xa0] sm:$0xff] %vm19, 0.0
    %41 = vst.msk [vmem:[#allocation2 + $0xa8] sm:$0xff] %vm19, 0.0
    %42 = vst.msk [vmem:[#allocation2 + $0xb0] sm:$0xff] %vm19, 0.0
    %43 = vst.msk [vmem:[#allocation2 + $0xb8] sm:$0xff] %vm19, 0.0
    %44 = vst.msk [vmem:[#allocation2 + $0xc0] sm:$0xff] %vm19, 0.0
    %45 = vst.msk [vmem:[#allocation2 + $0xc8] sm:$0xff] %vm19, 0.0
    %46 = vst.msk [vmem:[#allocation2 + $0xd0] sm:$0xff] %vm19, 0.0
    %47 = vst.msk [vmem:[#allocation2 + $0xd8] sm:$0xff] %vm19, 0.0
    %48 = vst.msk [vmem:[#allocation2 + $0xe0] sm:$0xff] %vm19, 0.0
    %49 = vst.msk [vmem:[#allocation2 + $0xe8] sm:$0xff] %vm19, 0.0
    %50 = vst.msk [vmem:[#allocation2 + $0xf0] sm:$0xff] %vm19, 0.0
    %51 = vst.msk [vmem:[#allocation2 + $0xf8] sm:$0xff] %vm19, 0.0
    %52 = vst.msk [vmem:[#allocation2 + $0x100] sm:$0xff] %vm19, 0.0
    %53 = vst.msk [vmem:[#allocation2 + $0x108] sm:$0xff] %vm19, 0.0
    %54 = vst.msk [vmem:[#allocation2 + $0x110] sm:$0xff] %vm19, 0.0
    %55 = vst.msk [vmem:[#allocation2 + $0x118] sm:$0xff] %vm19, 0.0
    %56 = vst.msk [vmem:[#allocation2 + $0x120] sm:$0xff] %vm19, 0.0
    %57 = vst.msk [vmem:[#allocation2 + $0x128] sm:$0xff] %vm19, 0.0
    %58 = vst.msk [vmem:[#allocation2 + $0x130] sm:$0xff] %vm19, 0.0
    %59 = vst.msk [vmem:[#allocation2 + $0x138] sm:$0xff] %vm19, 0.0
    %60 = vst.msk [vmem:[#allocation2 + $0x140] sm:$0xff] %vm19, 0.0
    %61 = vst.msk [vmem:[#allocation2 + $0x148] sm:$0xff] %vm19, 0.0
    %62 = vst.msk [vmem:[#allocation2 + $0x150] sm:$0xff] %vm19, 0.0
    %63 = vst.msk [vmem:[#allocation2 + $0x158] sm:$0xff] %vm19, 0.0
    %64 = vst.msk [vmem:[#allocation2 + $0x160] sm:$0xff] %vm19, 0.0
    %65 = vst.msk [vmem:[#allocation2 + $0x168] sm:$0xff] %vm19, 0.0
    %66 = vst.msk [vmem:[#allocation2 + $0x170] sm:$0xff] %vm19, 0.0
    %67 = vst.msk [vmem:[#allocation2 + $0x178] sm:$0xff] %vm19, 0.0
    %68 = vst.msk [vmem:[#allocation2 + $0x180] sm:$0xff] %vm19, 0.0
    %69 = vst.msk [vmem:[#allocation2 + $0x188] sm:$0xff] %vm19, 0.0
    %70 = vst.msk [vmem:[#allocation2 + $0x190] sm:$0xff] %vm19, 0.0
    %71 = vst.msk [vmem:[#allocation2 + $0x198] sm:$0xff] %vm19, 0.0
    %72 = vst.msk [vmem:[#allocation2 + $0x1a0] sm:$0xff] %vm19, 0.0
    %73 = vst.msk [vmem:[#allocation2 + $0x1a8] sm:$0xff] %vm19, 0.0
    %74 = vst.msk [vmem:[#allocation2 + $0x1b0] sm:$0xff] %vm19, 0.0
    %75 = vst.msk [vmem:[#allocation2 + $0x1b8] sm:$0xff] %vm19, 0.0
    %76 = vst.msk [vmem:[#allocation2 + $0x1c0] sm:$0xff] %vm19, 0.0
    %77 = vst.msk [vmem:[#allocation2 + $0x1c8] sm:$0xff] %vm19, 0.0
    %78 = vst.msk [vmem:[#allocation2 + $0x1d0] sm:$0xff] %vm19, 0.0
    %79 = vst.msk [vmem:[#allocation2 + $0x1d8] sm:$0xff] %vm19, 0.0
    %80 = vst.msk [vmem:[#allocation2 + $0x1e0] sm:$0xff] %vm19, 0.0
    %81 = vst.msk [vmem:[#allocation2 + $0x1e8] sm:$0xff] %vm19, 0.0
    %82 = vst.msk [vmem:[#allocation2 + $0x1f0] sm:$0xff] %vm19, 0.0
    %83 = vst.msk [vmem:[#allocation2 + $0x1f8] sm:$0xff] %vm19, 0.0
  $region17: #{matmul_bias.1} parent=0 // pred_fallthru
    _
  %v84 = vld [vmem:[#allocation2] sm:$0xff]
  %v85 = vld [vmem:[#allocation2 + $0x8] sm:$0xff]
  %v86 = vld [vmem:[#allocation2 + $0x10] sm:$0xff]
  %v87 = vld [vmem:[#allocation2 + $0x18] sm:$0xff]
  %v88 = vld [vmem:[#allocation2 + $0x20] sm:$0xff]
  %v89 = vld [vmem:[#allocation2 + $0x28] sm:$0xff]
  %v90 = vld [vmem:[#allocation2 + $0x30] sm:$0xff]
  %v91 = vld [vmem:[#allocation2 + $0x38] sm:$0xff]
  %v92 = vld [vmem:[#allocation2 + $0x40] sm:$0xff]
  %v93 = vld [vmem:[#allocation2 + $0x48] sm:$0xff]
  %v94 = vld [vmem:[#allocation2 + $0x50] sm:$0xff]
  %v95 = vld [vmem:[#allocation2 + $0x58] sm:$0xff]
  %v96 = vld [vmem:[#allocation2 + $0x60] sm:$0xff]
  %v97 = vld [vmem:[#allocation2 + $0x68] sm:$0xff]
  %v98 = vld [vmem:[#allocation2 + $0x70] sm:$0xff]
  %v99 = vld [vmem:[#allocation2 + $0x78] sm:$0xff]
  %v100 = vld [vmem:[#allocation2 + $0x80] sm:$0xff]
  %v101 = vld [vmem:[#allocation2 + $0x88] sm:$0xff]
  %v102 = vld [vmem:[#allocation2 + $0x90] sm:$0xff]
  %v103 = vld [vmem:[#allocation2 + $0x98] sm:$0xff]
  %v104 = vld [vmem:[#allocation2 + $0xa0] sm:$0xff]
  %v105 = vld [vmem:[#allocation2 + $0xa8] sm:$0xff]
  %v106 = vld [vmem:[#allocation2 + $0xb0] sm:$0xff]
  %v107 = vld [vmem:[#allocation2 + $0xb8] sm:$0xff]
  %v108 = vld [vmem:[#allocation2 + $0xc0] sm:$0xff]
  %v109 = vld [vmem:[#allocation2 + $0xc8] sm:$0xff]
  %v110 = vld [vmem:[#allocation2 + $0xd0] sm:$0xff]
  %v111 = vld [vmem:[#allocation2 + $0xd8] sm:$0xff]
  %v112 = vld [vmem:[#allocation2 + $0xe0] sm:$0xff]
  %v113 = vld [vmem:[#allocation2 + $0xe8] sm:$0xff]
  %v114 = vld [vmem:[#allocation2 + $0xf0] sm:$0xff]
  %v115 = vld [vmem:[#allocation2 + $0xf8] sm:$0xff]
  %v116 = vld [vmem:[#allocation2 + $0x100] sm:$0xff]
  %v117 = vld [vmem:[#allocation2 + $0x108] sm:$0xff]
  %v118 = vld [vmem:[#allocation2 + $0x110] sm:$0xff]
  %v119 = vld [vmem:[#allocation2 + $0x118] sm:$0xff]
  %v120 = vld [vmem:[#allocation2 + $0x120] sm:$0xff]
  %v121 = vld [vmem:[#allocation2 + $0x128] sm:$0xff]
  %v122 = vld [vmem:[#allocation2 + $0x130] sm:$0xff]
  %v123 = vld [vmem:[#allocation2 + $0x138] sm:$0xff]
  %v124 = vld [vmem:[#allocation2 + $0x140] sm:$0xff]
  %v125 = vld [vmem:[#allocation2 + $0x148] sm:$0xff]
  %v126 = vld [vmem:[#allocation2 + $0x150] sm:$0xff]
  %v127 = vld [vmem:[#allocation2 + $0x158] sm:$0xff]
  %v128 = vld [vmem:[#allocation2 + $0x160] sm:$0xff]
  %v129 = vld [vmem:[#allocation2 + $0x168] sm:$0xff]
  %v130 = vld [vmem:[#allocation2 + $0x170] sm:$0xff]
  %v131 = vld [vmem:[#allocation2 + $0x178] sm:$0xff]
  %v132 = vld [vmem:[#allocation2 + $0x180] sm:$0xff]
  %v133 = vld [vmem:[#allocation2 + $0x188] sm:$0xff]
  %v134 = vld [vmem:[#allocation2 + $0x190] sm:$0xff]
  %v135 = vld [vmem:[#allocation2 + $0x198] sm:$0xff]
  %v136 = vld [vmem:[#allocation2 + $0x1a0] sm:$0xff]
  %v137 = vld [vmem:[#allocation2 + $0x1a8] sm:$0xff]
  %v138 = vld [vmem:[#allocation2 + $0x1b0] sm:$0xff]
  %v139 = vld [vmem:[#allocation2 + $0x1b8] sm:$0xff]
  %v140 = vld [vmem:[#allocation2 + $0x1c0] sm:$0xff]
  %v141 = vld [vmem:[#allocation2 + $0x1c8] sm:$0xff]
  %v142 = vld [vmem:[#allocation2 + $0x1d0] sm:$0xff]
  %v143 = vld [vmem:[#allocation2 + $0x1d8] sm:$0xff]
  %v144 = vld [vmem:[#allocation2 + $0x1e0] sm:$0xff]
  %v145 = vld [vmem:[#allocation2 + $0x1e8] sm:$0xff]
  %v146 = vld [vmem:[#allocation2 + $0x1f0] sm:$0xff]
  %v147 = vld [vmem:[#allocation2 + $0x1f8] sm:$0xff]
  %v148 = vld [vmem:[%s0] sm:$0xf]
  %v149 = vld [vmem:[%s0 + $0x4] sm:$0xf]
  %v150 = vld [vmem:[%s0 + $0x8] sm:$0xf]
  %v151 = vld [vmem:[%s0 + $0xc] sm:$0xf]
  %v152 = vld [vmem:[%s0 + $0x10] sm:$0xf]
  %v153 = vld [vmem:[%s0 + $0x14] sm:$0xf]
  %v154 = vld [vmem:[%s0 + $0x18] sm:$0xf]
  %v155 = vld [vmem:[%s0 + $0x1c] sm:$0xf]
  %v156 = vld [vmem:[%s0 + $0x20] sm:$0xf]
  %v157 = vld [vmem:[%s0 + $0x24] sm:$0xf]
  %v158 = vld [vmem:[%s0 + $0x28] sm:$0xf]
  %v159 = vld [vmem:[%s0 + $0x2c] sm:$0xf]
  %v160 = vld [vmem:[%s0 + $0x30] sm:$0xf]
  %v161 = vld [vmem:[%s0 + $0x34] sm:$0xf]
  %v162 = vld [vmem:[%s0 + $0x38] sm:$0xf]
  %v163 = vld [vmem:[%s0 + $0x3c] sm:$0xf]
  %v164 = vld [vmem:[%s0 + $0x40] sm:$0xf]
  %v165 = vld [vmem:[%s0 + $0x44] sm:$0xf]
  %v166 = vld [vmem:[%s0 + $0x48] sm:$0xf]
  %v167 = vld [vmem:[%s0 + $0x4c] sm:$0xf]
  %v168 = vld [vmem:[%s0 + $0x50] sm:$0xf]
  %v169 = vld [vmem:[%s0 + $0x54] sm:$0xf]
  %v170 = vld [vmem:[%s0 + $0x58] sm:$0xf]
  %v171 = vld [vmem:[%s0 + $0x5c] sm:$0xf]
  %v172 = vld [vmem:[%s0 + $0x60] sm:$0xf]
  %v173 = vld [vmem:[%s0 + $0x64] sm:$0xf]
  %v174 = vld [vmem:[%s0 + $0x68] sm:$0xf]
  %v175 = vld [vmem:[%s0 + $0x6c] sm:$0xf]
  %v176 = vld [vmem:[%s0 + $0x70] sm:$0xf]
  %v177 = vld [vmem:[%s0 + $0x74] sm:$0xf]
  %v178 = vld [vmem:[%s0 + $0x78] sm:$0xf]
  %v179 = vld [vmem:[%s0 + $0x7c] sm:$0xf]
  %v180 = vld [vmem:[%s0 + $0x80] sm:$0xf]
  %v181 = vld [vmem:[%s0 + $0x84] sm:$0xf]
  %v182 = vld [vmem:[%s0 + $0x88] sm:$0xf]
  %v183 = vld [vmem:[%s0 + $0x8c] sm:$0xf]
  %v184 = vld [vmem:[%s0 + $0x90] sm:$0xf]
  %v185 = vld [vmem:[%s0 + $0x94] sm:$0xf]
  %v186 = vld [vmem:[%s0 + $0x98] sm:$0xf]
  %v187 = vld [vmem:[%s0 + $0x9c] sm:$0xf]
  %v188 = vld [vmem:[%s0 + $0xa0] sm:$0xf]
  %v189 = vld [vmem:[%s0 + $0xa4] sm:$0xf]
  %v190 = vld [vmem:[%s0 + $0xa8] sm:$0xf]
  %v191 = vld [vmem:[%s0 + $0xac] sm:$0xf]
  %v192 = vld [vmem:[%s0 + $0xb0] sm:$0xf]
  %v193 = vld [vmem:[%s0 + $0xb4] sm:$0xf]
  %v194 = vld [vmem:[%s0 + $0xb8] sm:$0xf]
  %v195 = vld [vmem:[%s0 + $0xbc] sm:$0xf]
  %v196 = vld [vmem:[%s0 + $0xc0] sm:$0xf]
  %v197 = vld [vmem:[%s0 + $0xc4] sm:$0xf]
  %v198 = vld [vmem:[%s0 + $0xc8] sm:$0xf]
  %v199 = vld [vmem:[%s0 + $0xcc] sm:$0xf]
  %v200 = vld [vmem:[%s0 + $0xd0] sm:$0xf]
  %v201 = vld [vmem:[%s0 + $0xd4] sm:$0xf]
  %v202 = vld [vmem:[%s0 + $0xd8] sm:$0xf]
  %v203 = vld [vmem:[%s0 + $0xdc] sm:$0xf]
  %v204 = vld [vmem:[%s0 + $0xe0] sm:$0xf]
  %v205 = vld [vmem:[%s0 + $0xe4] sm:$0xf]
  %v206 = vld [vmem:[%s0 + $0xe8] sm:$0xf]
  %v207 = vld [vmem:[%s0 + $0xec] sm:$0xf]
  %v208 = vld [vmem:[%s0 + $0xf0] sm:$0xf]
  %v209 = vld [vmem:[%s0 + $0xf4] sm:$0xf]
  %v210 = vld [vmem:[%s0 + $0xf8] sm:$0xf]
  %v211 = vld [vmem:[%s0 + $0xfc] sm:$0xf]
  %v212 = vld [vmem:[%s1] sm:$0xf]
  %v213 = vld [vmem:[%s1 + $0x4] sm:$0xf]
  %v214 = vld [vmem:[%s1 + $0x8] sm:$0xf]
  %v215 = vld [vmem:[%s1 + $0xc] sm:$0xf]
  %v216 = vld [vmem:[%s1 + $0x10] sm:$0xf]
  %v217 = vld [vmem:[%s1 + $0x14] sm:$0xf]
  %v282 = vunpack.c.l.b16 %v148
  %v283 = vunpack.c.l.b16 %v149
  %v284 = vunpack.c.l.b16 %v150
  %v285 = vunpack.c.l.b16 %v151
  %v286 = vunpack.c.l.b16 %v152
  %v287 = vunpack.c.l.b16 %v153
  %v288 = vunpack.c.l.b16 %v154
  %v289 = vunpack.c.l.b16 %v155
  %v290 = vunpack.c.l.b16 %v156
  %v291 = vunpack.c.l.b16 %v157
  %v292 = vunpack.c.l.b16 %v158
  %v293 = vunpack.c.l.b16 %v159
  %v294 = vunpack.c.l.b16 %v160
  %v295 = vunpack.c.l.b16 %v161
  %v296 = vunpack.c.l.b16 %v162
  %v297 = vunpack.c.l.b16 %v163
  %v298 = vunpack.c.l.b16 %v164
  %v299 = vunpack.c.l.b16 %v165
  %v300 = vunpack.c.l.b16 %v166
  %v301 = vunpack.c.l.b16 %v167
  %v302 = vunpack.c.l.b16 %v168
  %v303 = vunpack.c.l.b16 %v169
  %v304 = vunpack.c.l.b16 %v170
  %v305 = vunpack.c.l.b16 %v171
  %v306 = vunpack.c.l.b16 %v172
  %v307 = vunpack.c.l.b16 %v173
  %v308 = vunpack.c.l.b16 %v174
  %v309 = vunpack.c.l.b16 %v175
  %v310 = vunpack.c.l.b16 %v176
  %v311 = vunpack.c.l.b16 %v177
  %v312 = vunpack.c.l.b16 %v178
  %v313 = vunpack.c.l.b16 %v179
  %v314 = vunpack.c.l.b16 %v180
  %v315 = vunpack.c.l.b16 %v181
  %v316 = vunpack.c.l.b16 %v182
  %v317 = vunpack.c.l.b16 %v183
  %v318 = vunpack.c.l.b16 %v184
  %v319 = vunpack.c.l.b16 %v185
  %v320 = vunpack.c.l.b16 %v186
  %v321 = vunpack.c.l.b16 %v187
  %v322 = vunpack.c.l.b16 %v188
  %v323 = vunpack.c.l.b16 %v189
  %v324 = vunpack.c.l.b16 %v190
  %v325 = vunpack.c.l.b16 %v191
  %v326 = vunpack.c.l.b16 %v192
  %v327 = vunpack.c.l.b16 %v193
  %v328 = vunpack.c.l.b16 %v194
  %v329 = vunpack.c.l.b16 %v195
  %v330 = vunpack.c.l.b16 %v196
  %v331 = vunpack.c.l.b16 %v197
  %v332 = vunpack.c.l.b16 %v198
  %v333 = vunpack.c.l.b16 %v199
  %v334 = vunpack.c.l.b16 %v200
  %v335 = vunpack.c.l.b16 %v201
  %v336 = vunpack.c.l.b16 %v202
  %v337 = vunpack.c.l.b16 %v203
  %v338 = vunpack.c.l.b16 %v204
  %v339 = vunpack.c.l.b16 %v205
  %v340 = vunpack.c.l.b16 %v206
  %v341 = vunpack.c.l.b16 %v207
  %v342 = vunpack.c.l.b16 %v208
  %v343 = vunpack.c.l.b16 %v209
  %v344 = vunpack.c.l.b16 %v210
  %v345 = vunpack.c.l.b16 %v211
  %v346 = vpack.c.b16 %v283, %v282
  %v347 = vpack.c.b16 %v285, %v284
  %v348 = vpack.c.b16 %v287, %v286
  %v349 = vpack.c.b16 %v289, %v288
  %v350 = vpack.c.b16 %v291, %v290
  %v351 = vpack.c.b16 %v293, %v292
  %v352 = vpack.c.b16 %v295, %v294
  %v353 = vpack.c.b16 %v297, %v296
  %v354 = vpack.c.b16 %v299, %v298
  %v355 = vpack.c.b16 %v301, %v300
  %v356 = vpack.c.b16 %v303, %v302
  %v357 = vpack.c.b16 %v305, %v304
  %v358 = vpack.c.b16 %v307, %v306
  %v359 = vpack.c.b16 %v309, %v308
  %v360 = vpack.c.b16 %v311, %v310
  %v361 = vpack.c.b16 %v313, %v312
  %v362 = vpack.c.b16 %v315, %v314
  %v363 = vpack.c.b16 %v317, %v316
  %v364 = vpack.c.b16 %v319, %v318
  %v365 = vpack.c.b16 %v321, %v320
  %v366 = vpack.c.b16 %v323, %v322
  %v367 = vpack.c.b16 %v325, %v324
  %v368 = vpack.c.b16 %v327, %v326
  %v369 = vpack.c.b16 %v329, %v328
  %v370 = vpack.c.b16 %v331, %v330
  %v371 = vpack.c.b16 %v333, %v332
  %v372 = vpack.c.b16 %v335, %v334
  %v373 = vpack.c.b16 %v337, %v336
  %v374 = vpack.c.b16 %v339, %v338
  %v375 = vpack.c.b16 %v341, %v340
  %v376 = vpack.c.b16 %v343, %v342
  %v377 = vpack.c.b16 %v345, %v344
  %v384 = vunpack.c.l.b16 %v212
  %v385 = vunpack.c.l.b16 %v213
  %v386 = vunpack.c.l.b16 %v214
  %v387 = vunpack.c.l.b16 %v215
  %v388 = vunpack.c.l.b16 %v216
  %v389 = vunpack.c.l.b16 %v217
  %v390 = vpack.c.b16 %v385, %v384
  %v391 = vpack.c.b16 %v387, %v386
  %v392 = vpack.c.b16 %v389, %v388
  %vm396 = vcmask 392192
  %v398 = vsel %vm396, %v346, 0
  %v401 = vsel %vm396, %v347, 0
  %v404 = vsel %vm396, %v348, 0
  %v407 = vsel %vm396, %v349, 0
  %v410 = vsel %vm396, %v350, 0
  %v413 = vsel %vm396, %v351, 0
  %v416 = vsel %vm396, %v352, 0
  %v419 = vsel %vm396, %v353, 0
  %v422 = vsel %vm396, %v354, 0
  %v425 = vsel %vm396, %v355, 0
  %v428 = vsel %vm396, %v356, 0
  %v431 = vsel %vm396, %v357, 0
  %v434 = vsel %vm396, %v358, 0
  %v437 = vsel %vm396, %v359, 0
  %v440 = vsel %vm396, %v360, 0
  %v443 = vsel %vm396, %v361, 0
  %v446 = vsel %vm396, %v362, 0
  %v449 = vsel %vm396, %v363, 0
  %v452 = vsel %vm396, %v364, 0
  %v455 = vsel %vm396, %v365, 0
  %v458 = vsel %vm396, %v366, 0
  %v461 = vsel %vm396, %v367, 0
  %v464 = vsel %vm396, %v368, 0
  %v467 = vsel %vm396, %v369, 0
  %v470 = vsel %vm396, %v370, 0
  %v473 = vsel %vm396, %v371, 0
  %v476 = vsel %vm396, %v372, 0
  %v479 = vsel %vm396, %v373, 0
  %v482 = vsel %vm396, %v374, 0
  %v485 = vsel %vm396, %v375, 0
  %v488 = vsel %vm396, %v376, 0
  %v491 = vsel %vm396, %v377, 0
  %493 = vmatprep.subr.bf16.mxu0 0
  %494 = vmatpush1.bf16.msra.mxu0 %v390
  %495 = vmatprep.subr.bf16.mxu0 0
  %496 = vmatpush1.bf16.msra.mxu0 %v391
  %497 = vmatprep.subr.bf16.mxu0 0
  %498 = vmatpush1.bf16.msra.mxu0 %v392
  %499 = vmatprep.subr.bf16.mxu0 0
  %500 = vmatpush1.bf16.msra.mxu0 0
  %501 = vmatprep.subr.bf16.mxu0 0
  %502 = vmatpush1.bf16.msra.mxu0 0
  %503 = vmatprep.subr.bf16.mxu0 0
  %504 = vmatpush1.bf16.msra.mxu0 0
  %505 = vmatprep.subr.bf16.mxu0 0
  %506 = vmatpush1.bf16.msra.mxu0 0
  %507 = vmatprep.subr.bf16.mxu0 0
  %508 = vmatpush1.bf16.msra.mxu0 0
  %509 = vmatprep.subr.bf16.mxu0 0
  %510 = vmatpush1.bf16.msra.mxu0 0
  %511 = vmatprep.subr.bf16.mxu0 0
  %512 = vmatpush1.bf16.msra.mxu0 0
  %513 = vmatprep.subr.bf16.mxu0 0
  %514 = vmatpush1.bf16.msra.mxu0 0
  %515 = vmatprep.subr.bf16.mxu0 0
  %516 = vmatpush1.bf16.msra.mxu0 0
  %517 = vmatprep.subr.bf16.mxu0 0
  %518 = vmatpush1.bf16.msra.mxu0 0
  %519 = vmatprep.subr.bf16.mxu0 0
  %520 = vmatpush1.bf16.msra.mxu0 0
  %521 = vmatprep.subr.bf16.mxu0 0
  %522 = vmatpush1.bf16.msra.mxu0 0
  %523 = vmatprep.subr.bf16.mxu0 0
  %524 = vmatpush1.bf16.msra.mxu0 0
  %525 = vmatprep.mubr.bf16.mxu0 0
  %526 = vmatmul.mubr.bf16.gmra.mrb[0].mxu0 %v398
  %v527 = vpop.f32.mrb[0].mxu0
  %v528 = vadd.f32 0.0, %v527
  %v529 = vpop.f32.mrb[0].mxu0
  %v530 = vpop.f32.mrb[0].mxu0
  %v531 = vadd.f32 0.0, %v530
  %v532 = vpop.f32.mrb[0].mxu0
  %533 = vmatprep.mubr.bf16.mxu0 0
  %534 = vmatmul.mubr.bf16.gmra.mrb[0].mxu0 %v401
  %v535 = vpop.f32.mrb[0].mxu0
  %v536 = vadd.f32 0.0, %v535
  %v537 = vpop.f32.mrb[0].mxu0
  %v538 = vpop.f32.mrb[0].mxu0
  %v539 = vadd.f32 0.0, %v538
  %v540 = vpop.f32.mrb[0].mxu0
  %541 = vmatprep.mubr.bf16.mxu0 0
  %542 = vmatmul.mubr.bf16.gmra.mrb[0].mxu0 %v404
  %v543 = vpop.f32.mrb[0].mxu0
  %v544 = vadd.f32 0.0, %v543
  %v545 = vpop.f32.mrb[0].mxu0
  %v546 = vpop.f32.mrb[0].mxu0
  %v547 = vadd.f32 0.0, %v546
  %v548 = vpop.f32.mrb[0].mxu0
  %549 = vmatprep.mubr.bf16.mxu0 0
  %550 = vmatmul.mubr.bf16.gmra.mrb[0].mxu0 %v407
  %v551 = vpop.f32.mrb[0].mxu0
  %v552 = vadd.f32 0.0, %v551
  %v553 = vpop.f32.mrb[0].mxu0
  %v554 = vpop.f32.mrb[0].mxu0
  %v555 = vadd.f32 0.0, %v554
  %v556 = vpop.f32.mrb[0].mxu0
  %557 = vmatprep.mubr.bf16.mxu0 0
  %558 = vmatmul.mubr.bf16.gmra.mrb[0].mxu0 %v410
  %v559 = vpop.f32.mrb[0].mxu0
  %v560 = vadd.f32 0.0, %v559
  %v561 = vpop.f32.mrb[0].mxu0
  %v562 = vpop.f32.mrb[0].mxu0
  %v563 = vadd.f32 0.0, %v562
  %v564 = vpop.f32.mrb[0].mxu0
  %565 = vmatprep.mubr.bf16.mxu0 0
  %566 = vmatmul.mubr.bf16.gmra.mrb[0].mxu0 %v413
  %v567 = vpop.f32.mrb[0].mxu0
  %v568 = vadd.f32 0.0, %v567
  %v569 = vpop.f32.mrb[0].mxu0
  %v570 = vpop.f32.mrb[0].mxu0
  %v571 = vadd.f32 0.0, %v570
  %v572 = vpop.f32.mrb[0].mxu0
  %573 = vmatprep.mubr.bf16.mxu0 0
  %574 = vmatmul.mubr.bf16.gmra.mrb[0].mxu0 %v416
  %v575 = vpop.f32.mrb[0].mxu0
  %v576 = vadd.f32 0.0, %v575
  %v577 = vpop.f32.mrb[0].mxu0
  %v578 = vpop.f32.mrb[0].mxu0
  %v579 = vadd.f32 0.0, %v578
  %v580 = vpop.f32.mrb[0].mxu0
  %581 = vmatprep.mubr.bf16.mxu0 0
  %582 = vmatmul.mubr.bf16.gmra.mrb[0].mxu0 %v419
  %v583 = vpop.f32.mrb[0].mxu0
  %v584 = vadd.f32 0.0, %v583
  %v585 = vpop.f32.mrb[0].mxu0
  %v586 = vpop.f32.mrb[0].mxu0
  %v587 = vadd.f32 0.0, %v586
  %v588 = vpop.f32.mrb[0].mxu0
  %589 = vmatprep.mubr.bf16.mxu0 0
  %590 = vmatmul.mubr.bf16.gmra.mrb[0].mxu0 %v422
  %v591 = vpop.f32.mrb[0].mxu0
  %v592 = vadd.f32 0.0, %v591
  %v593 = vpop.f32.mrb[0].mxu0
  %v594 = vpop.f32.mrb[0].mxu0
  %v595 = vadd.f32 0.0, %v594
  %v596 = vpop.f32.mrb[0].mxu0
  %597 = vmatprep.mubr.bf16.mxu0 0
  %598 = vmatmul.mubr.bf16.gmra.mrb[0].mxu0 %v425
  %v599 = vpop.f32.mrb[0].mxu0
  %v600 = vadd.f32 0.0, %v599
  %v601 = vpop.f32.mrb[0].mxu0
  %v602 = vpop.f32.mrb[0].mxu0
  %v603 = vadd.f32 0.0, %v602
  %v604 = vpop.f32.mrb[0].mxu0
  %605 = vmatprep.mubr.bf16.mxu0 0
  %606 = vmatmul.mubr.bf16.gmra.mrb[0].mxu0 %v428
  %v607 = vpop.f32.mrb[0].mxu0
  %v608 = vadd.f32 0.0, %v607
  %v609 = vpop.f32.mrb[0].mxu0
  %v610 = vpop.f32.mrb[0].mxu0
  %v611 = vadd.f32 0.0, %v610
  %v612 = vpop.f32.mrb[0].mxu0
  %613 = vmatprep.mubr.bf16.mxu0 0
  %614 = vmatmul.mubr.bf16.gmra.mrb[0].mxu0 %v431
  %v615 = vpop.f32.mrb[0].mxu0
  %v616 = vadd.f32 0.0, %v615
  %v617 = vpop.f32.mrb[0].mxu0
  %v618 = vpop.f32.mrb[0].mxu0
  %v619 = vadd.f32 0.0, %v618
  %v620 = vpop.f32.mrb[0].mxu0
  %621 = vmatprep.mubr.bf16.mxu0 0
  %622 = vmatmul.mubr.bf16.gmra.mrb[0].mxu0 %v434
  %v623 = vpop.f32.mrb[0].mxu0
  %v624 = vadd.f32 0.0, %v623
  %v625 = vpop.f32.mrb[0].mxu0
  %v626 = vpop.f32.mrb[0].mxu0
  %v627 = vadd.f32 0.0, %v626
  %v628 = vpop.f32.mrb[0].mxu0
  %629 = vmatprep.mubr.bf16.mxu0 0
  %630 = vmatmul.mubr.bf16.gmra.mrb[0].mxu0 %v437
  %v631 = vpop.f32.mrb[0].mxu0
  %v632 = vadd.f32 0.0, %v631
  %v633 = vpop.f32.mrb[0].mxu0
  %v634 = vpop.f32.mrb[0].mxu0
  %v635 = vadd.f32 0.0, %v634
  %v636 = vpop.f32.mrb[0].mxu0
  %637 = vmatprep.mubr.bf16.mxu0 0
  %638 = vmatmul.mubr.bf16.gmra.mrb[0].mxu0 %v440
  %v639 = vpop.f32.mrb[0].mxu0
  %v640 = vadd.f32 0.0, %v639
  %v641 = vpop.f32.mrb[0].mxu0
  %v642 = vpop.f32.mrb[0].mxu0
  %v643 = vadd.f32 0.0, %v642
  %v644 = vpop.f32.mrb[0].mxu0
  %645 = vmatprep.mubr.bf16.mxu0 0
  %646 = vmatmul.mubr.bf16.gmra.mrb[0].mxu0 %v443
  %v647 = vpop.f32.mrb[0].mxu0
  %v648 = vadd.f32 0.0, %v647
  %v649 = vpop.f32.mrb[0].mxu0
  %v650 = vpop.f32.mrb[0].mxu0
  %v651 = vadd.f32 0.0, %v650
  %v652 = vpop.f32.mrb[0].mxu0
  %653 = vmatprep.mubr.bf16.mxu0 0
  %654 = vmatmul.mubr.bf16.gmra.mrb[0].mxu0 %v446
  %v655 = vpop.f32.mrb[0].mxu0
  %v656 = vadd.f32 0.0, %v655
  %v657 = vpop.f32.mrb[0].mxu0
  %v658 = vpop.f32.mrb[0].mxu0
  %v659 = vadd.f32 0.0, %v658
  %v660 = vpop.f32.mrb[0].mxu0
  %661 = vmatprep.mubr.bf16.mxu0 0
  %662 = vmatmul.mubr.bf16.gmra.mrb[0].mxu0 %v449
  %v663 = vpop.f32.mrb[0].mxu0
  %v664 = vadd.f32 0.0, %v663
  %v665 = vpop.f32.mrb[0].mxu0
  %v666 = vpop.f32.mrb[0].mxu0
  %v667 = vadd.f32 0.0, %v666
  %v668 = vpop.f32.mrb[0].mxu0
  %669 = vmatprep.mubr.bf16.mxu0 0
  %670 = vmatmul.mubr.bf16.gmra.mrb[0].mxu0 %v452
  %v671 = vpop.f32.mrb[0].mxu0
  %v672 = vadd.f32 0.0, %v671
  %v673 = vpop.f32.mrb[0].mxu0
  %v674 = vpop.f32.mrb[0].mxu0
  %v675 = vadd.f32 0.0, %v674
  %v676 = vpop.f32.mrb[0].mxu0
  %677 = vmatprep.mubr.bf16.mxu0 0
  %678 = vmatmul.mubr.bf16.gmra.mrb[0].mxu0 %v455
  %v679 = vpop.f32.mrb[0].mxu0
  %v680 = vadd.f32 0.0, %v679
  %v681 = vpop.f32.mrb[0].mxu0
  %v682 = vpop.f32.mrb[0].mxu0
  %v683 = vadd.f32 0.0, %v682
  %v684 = vpop.f32.mrb[0].mxu0
  %685 = vmatprep.mubr.bf16.mxu0 0
  %686 = vmatmul.mubr.bf16.gmra.mrb[0].mxu0 %v458
  %v687 = vpop.f32.mrb[0].mxu0
  %v688 = vadd.f32 0.0, %v687
  %v689 = vpop.f32.mrb[0].mxu0
  %v690 = vpop.f32.mrb[0].mxu0
  %v691 = vadd.f32 0.0, %v690
  %v692 = vpop.f32.mrb[0].mxu0
  %693 = vmatprep.mubr.bf16.mxu0 0
  %694 = vmatmul.mubr.bf16.gmra.mrb[0].mxu0 %v461
  %v695 = vpop.f32.mrb[0].mxu0
  %v696 = vadd.f32 0.0, %v695
  %v697 = vpop.f32.mrb[0].mxu0
  %v698 = vpop.f32.mrb[0].mxu0
  %v699 = vadd.f32 0.0, %v698
  %v700 = vpop.f32.mrb[0].mxu0
  %701 = vmatprep.mubr.bf16.mxu0 0
  %702 = vmatmul.mubr.bf16.gmra.mrb[0].mxu0 %v464
  %v703 = vpop.f32.mrb[0].mxu0
  %v704 = vadd.f32 0.0, %v703
  %v705 = vpop.f32.mrb[0].mxu0
  %v706 = vpop.f32.mrb[0].mxu0
  %v707 = vadd.f32 0.0, %v706
  %v708 = vpop.f32.mrb[0].mxu0
  %709 = vmatprep.mubr.bf16.mxu0 0
  %710 = vmatmul.mubr.bf16.gmra.mrb[0].mxu0 %v467
  %v711 = vpop.f32.mrb[0].mxu0
  %v712 = vadd.f32 0.0, %v711
  %v713 = vpop.f32.mrb[0].mxu0
  %v714 = vpop.f32.mrb[0].mxu0
  %v715 = vadd.f32 0.0, %v714
  %v716 = vpop.f32.mrb[0].mxu0
  %717 = vmatprep.mubr.bf16.mxu0 0
  %718 = vmatmul.mubr.bf16.gmra.mrb[0].mxu0 %v470
  %v719 = vpop.f32.mrb[0].mxu0
  %v720 = vadd.f32 0.0, %v719
  %v721 = vpop.f32.mrb[0].mxu0
  %v722 = vpop.f32.mrb[0].mxu0
  %v723 = vadd.f32 0.0, %v722
  %v724 = vpop.f32.mrb[0].mxu0
  %725 = vmatprep.mubr.bf16.mxu0 0
  %726 = vmatmul.mubr.bf16.gmra.mrb[0].mxu0 %v473
  %v727 = vpop.f32.mrb[0].mxu0
  %v728 = vadd.f32 0.0, %v727
  %v729 = vpop.f32.mrb[0].mxu0
  %v730 = vpop.f32.mrb[0].mxu0
  %v731 = vadd.f32 0.0, %v730
  %v732 = vpop.f32.mrb[0].mxu0
  %733 = vmatprep.mubr.bf16.mxu0 0
  %734 = vmatmul.mubr.bf16.gmra.mrb[0].mxu0 %v476
  %v735 = vpop.f32.mrb[0].mxu0
  %v736 = vadd.f32 0.0, %v735
  %v737 = vpop.f32.mrb[0].mxu0
  %v738 = vpop.f32.mrb[0].mxu0
  %v739 = vadd.f32 0.0, %v738
  %v740 = vpop.f32.mrb[0].mxu0
  %741 = vmatprep.mubr.bf16.mxu0 0
  %742 = vmatmul.mubr.bf16.gmra.mrb[0].mxu0 %v479
  %v743 = vpop.f32.mrb[0].mxu0
  %v744 = vadd.f32 0.0, %v743
  %v745 = vpop.f32.mrb[0].mxu0
  %v746 = vpop.f32.mrb[0].mxu0
  %v747 = vadd.f32 0.0, %v746
  %v748 = vpop.f32.mrb[0].mxu0
  %749 = vmatprep.mubr.bf16.mxu0 0
  %750 = vmatmul.mubr.bf16.gmra.mrb[0].mxu0 %v482
  %v751 = vpop.f32.mrb[0].mxu0
  %v752 = vadd.f32 0.0, %v751
  %v753 = vpop.f32.mrb[0].mxu0
  %v754 = vpop.f32.mrb[0].mxu0
  %v755 = vadd.f32 0.0, %v754
  %v756 = vpop.f32.mrb[0].mxu0
  %757 = vmatprep.mubr.bf16.mxu0 0
  %758 = vmatmul.mubr.bf16.gmra.mrb[0].mxu0 %v485
  %v759 = vpop.f32.mrb[0].mxu0
  %v760 = vadd.f32 0.0, %v759
  %v761 = vpop.f32.mrb[0].mxu0
  %v762 = vpop.f32.mrb[0].mxu0
  %v763 = vadd.f32 0.0, %v762
  %v764 = vpop.f32.mrb[0].mxu0
  %765 = vmatprep.mubr.bf16.mxu0 0
  %766 = vmatmul.mubr.bf16.gmra.mrb[0].mxu0 %v488
  %v767 = vpop.f32.mrb[0].mxu0
  %v768 = vadd.f32 0.0, %v767
  %v769 = vpop.f32.mrb[0].mxu0
  %v770 = vpop.f32.mrb[0].mxu0
  %v771 = vadd.f32 0.0, %v770
  %v772 = vpop.f32.mrb[0].mxu0
  %773 = vmatprep.mubr.bf16.mxu0 0
  %774 = vmatmul.mubr.bf16.gmra.mrb[0].mxu0 %v491
  %v775 = vpop.f32.mrb[0].mxu0
  %v776 = vadd.f32 0.0, %v775
  %v777 = vpop.f32.mrb[0].mxu0
  %v778 = vpop.f32.mrb[0].mxu0
  %v779 = vadd.f32 0.0, %v778
  %v780 = vpop.f32.mrb[0].mxu0
  %781 = vdwg.mxu0
  %v782 = vadd.f32 %v84, %v528
  %v783 = vadd.f32 %v85, %v531
  %v784 = vadd.f32 %v86, %v536
  %v785 = vadd.f32 %v87, %v539
  %v786 = vadd.f32 %v88, %v544
  %v787 = vadd.f32 %v89, %v547
  %v788 = vadd.f32 %v90, %v552
  %v789 = vadd.f32 %v91, %v555
  %v790 = vadd.f32 %v92, %v560
  %v791 = vadd.f32 %v93, %v563
  %v792 = vadd.f32 %v94, %v568
  %v793 = vadd.f32 %v95, %v571
  %v794 = vadd.f32 %v96, %v576
  %v795 = vadd.f32 %v97, %v579
  %v796 = vadd.f32 %v98, %v584
  %v797 = vadd.f32 %v99, %v587
  %v798 = vadd.f32 %v100, %v592
  %v799 = vadd.f32 %v101, %v595
  %v800 = vadd.f32 %v102, %v600
  %v801 = vadd.f32 %v103, %v603
  %v802 = vadd.f32 %v104, %v608
  %v803 = vadd.f32 %v105, %v611
  %v804 = vadd.f32 %v106, %v616
  %v805 = vadd.f32 %v107, %v619
  %v806 = vadd.f32 %v108, %v624
  %v807 = vadd.f32 %v109, %v627
  %v808 = vadd.f32 %v110, %v632
  %v809 = vadd.f32 %v111, %v635
  %v810 = vadd.f32 %v112, %v640
  %v811 = vadd.f32 %v113, %v643
  %v812 = vadd.f32 %v114, %v648
  %v813 = vadd.f32 %v115, %v651
  %v814 = vadd.f32 %v116, %v656
  %v815 = vadd.f32 %v117, %v659
  %v816 = vadd.f32 %v118, %v664
  %v817 = vadd.f32 %v119, %v667
  %v818 = vadd.f32 %v120, %v672
  %v819 = vadd.f32 %v121, %v675
  %v820 = vadd.f32 %v122, %v680
  %v821 = vadd.f32 %v123, %v683
  %v822 = vadd.f32 %v124, %v688
  %v823 = vadd.f32 %v125, %v691
  %v824 = vadd.f32 %v126, %v696
  %v825 = vadd.f32 %v127, %v699
  %v826 = vadd.f32 %v128, %v704
  %v827 = vadd.f32 %v129, %v707
  %v828 = vadd.f32 %v130, %v712
  %v829 = vadd.f32 %v131, %v715
  %v830 = vadd.f32 %v132, %v720
  %v831 = vadd.f32 %v133, %v723
  %v832 = vadd.f32 %v134, %v728
  %v833 = vadd.f32 %v135, %v731
  %v834 = vadd.f32 %v136, %v736
  %v835 = vadd.f32 %v137, %v739
  %v836 = vadd.f32 %v138, %v744
  %v837 = vadd.f32 %v139, %v747
  %v838 = vadd.f32 %v140, %v752
  %v839 = vadd.f32 %v141, %v755
  %v840 = vadd.f32 %v142, %v760
  %v841 = vadd.f32 %v143, %v763
  %v842 = vadd.f32 %v144, %v768
  %v843 = vadd.f32 %v145, %v771
  %v844 = vadd.f32 %v146, %v776
  %v845 = vadd.f32 %v147, %v779
  %vm846 = vcmask 261120
  %847 = vst.msk [vmem:[#allocation2] sm:$0xff] %vm846, %v782
  %848 = vst.msk [vmem:[#allocation2 + $0x8] sm:$0xff] %vm846, %v783
  %849 = vst.msk [vmem:[#allocation2 + $0x10] sm:$0xff] %vm846, %v784
  %850 = vst.msk [vmem:[#allocation2 + $0x18] sm:$0xff] %vm846, %v785
  %851 = vst.msk [vmem:[#allocation2 + $0x20] sm:$0xff] %vm846, %v786
  %852 = vst.msk [vmem:[#allocation2 + $0x28] sm:$0xff] %vm846, %v787
  %853 = vst.msk [vmem:[#allocation2 + $0x30] sm:$0xff] %vm846, %v788
  %854 = vst.msk [vmem:[#allocation2 + $0x38] sm:$0xff] %vm846, %v789
  %855 = vst.msk [vmem:[#allocation2 + $0x40] sm:$0xff] %vm846, %v790
  %856 = vst.msk [vmem:[#allocation2 + $0x48] sm:$0xff] %vm846, %v791
  %857 = vst.msk [vmem:[#allocation2 + $0x50] sm:$0xff] %vm846, %v792
  %858 = vst.msk [vmem:[#allocation2 + $0x58] sm:$0xff] %vm846, %v793
  %859 = vst.msk [vmem:[#allocation2 + $0x60] sm:$0xff] %vm846, %v794
  %860 = vst.msk [vmem:[#allocation2 + $0x68] sm:$0xff] %vm846, %v795
  %861 = vst.msk [vmem:[#allocation2 + $0x70] sm:$0xff] %vm846, %v796
  %862 = vst.msk [vmem:[#allocation2 + $0x78] sm:$0xff] %vm846, %v797
  %863 = vst.msk [vmem:[#allocation2 + $0x80] sm:$0xff] %vm846, %v798
  %864 = vst.msk [vmem:[#allocation2 + $0x88] sm:$0xff] %vm846, %v799
  %865 = vst.msk [vmem:[#allocation2 + $0x90] sm:$0xff] %vm846, %v800
  %866 = vst.msk [vmem:[#allocation2 + $0x98] sm:$0xff] %vm846, %v801
  %867 = vst.msk [vmem:[#allocation2 + $0xa0] sm:$0xff] %vm846, %v802
  %868 = vst.msk [vmem:[#allocation2 + $0xa8] sm:$0xff] %vm846, %v803
  %869 = vst.msk [vmem:[#allocation2 + $0xb0] sm:$0xff] %vm846, %v804
  %870 = vst.msk [vmem:[#allocation2 + $0xb8] sm:$0xff] %vm846, %v805
  %871 = vst.msk [vmem:[#allocation2 + $0xc0] sm:$0xff] %vm846, %v806
  %872 = vst.msk [vmem:[#allocation2 + $0xc8] sm:$0xff] %vm846, %v807
  %873 = vst.msk [vmem:[#allocation2 + $0xd0] sm:$0xff] %vm846, %v808
  %874 = vst.msk [vmem:[#allocation2 + $0xd8] sm:$0xff] %vm846, %v809
  %875 = vst.msk [vmem:[#allocation2 + $0xe0] sm:$0xff] %vm846, %v810
  %876 = vst.msk [vmem:[#allocation2 + $0xe8] sm:$0xff] %vm846, %v811
  %877 = vst.msk [vmem:[#allocation2 + $0xf0] sm:$0xff] %vm846, %v812
  %878 = vst.msk [vmem:[#allocation2 + $0xf8] sm:$0xff] %vm846, %v813
  %879 = vst.msk [vmem:[#allocation2 + $0x100] sm:$0xff] %vm846, %v814
  %880 = vst.msk [vmem:[#allocation2 + $0x108] sm:$0xff] %vm846, %v815
  %881 = vst.msk [vmem:[#allocation2 + $0x110] sm:$0xff] %vm846, %v816
  %882 = vst.msk [vmem:[#allocation2 + $0x118] sm:$0xff] %vm846, %v817
  %883 = vst.msk [vmem:[#allocation2 + $0x120] sm:$0xff] %vm846, %v818
  %884 = vst.msk [vmem:[#allocation2 + $0x128] sm:$0xff] %vm846, %v819
  %885 = vst.msk [vmem:[#allocation2 + $0x130] sm:$0xff] %vm846, %v820
  %886 = vst.msk [vmem:[#allocation2 + $0x138] sm:$0xff] %vm846, %v821
  %887 = vst.msk [vmem:[#allocation2 + $0x140] sm:$0xff] %vm846, %v822
  %888 = vst.msk [vmem:[#allocation2 + $0x148] sm:$0xff] %vm846, %v823
  %889 = vst.msk [vmem:[#allocation2 + $0x150] sm:$0xff] %vm846, %v824
  %890 = vst.msk [vmem:[#allocation2 + $0x158] sm:$0xff] %vm846, %v825
  %891 = vst.msk [vmem:[#allocation2 + $0x160] sm:$0xff] %vm846, %v826
  %892 = vst.msk [vmem:[#allocation2 + $0x168] sm:$0xff] %vm846, %v827
  %893 = vst.msk [vmem:[#allocation2 + $0x170] sm:$0xff] %vm846, %v828
  %894 = vst.msk [vmem:[#allocation2 + $0x178] sm:$0xff] %vm846, %v829
  %895 = vst.msk [vmem:[#allocation2 + $0x180] sm:$0xff] %vm846, %v830
  %896 = vst.msk [vmem:[#allocation2 + $0x188] sm:$0xff] %vm846, %v831
  %897 = vst.msk [vmem:[#allocation2 + $0x190] sm:$0xff] %vm846, %v832
  %898 = vst.msk [vmem:[#allocation2 + $0x198] sm:$0xff] %vm846, %v833
  %899 = vst.msk [vmem:[#allocation2 + $0x1a0] sm:$0xff] %vm846, %v834
  %900 = vst.msk [vmem:[#allocation2 + $0x1a8] sm:$0xff] %vm846, %v835
  %901 = vst.msk [vmem:[#allocation2 + $0x1b0] sm:$0xff] %vm846, %v836
  %902 = vst.msk [vmem:[#allocation2 + $0x1b8] sm:$0xff] %vm846, %v837
  %903 = vst.msk [vmem:[#allocation2 + $0x1c0] sm:$0xff] %vm846, %v838
  %904 = vst.msk [vmem:[#allocation2 + $0x1c8] sm:$0xff] %vm846, %v839
  %905 = vst.msk [vmem:[#allocation2 + $0x1d0] sm:$0xff] %vm846, %v840
  %906 = vst.msk [vmem:[#allocation2 + $0x1d8] sm:$0xff] %vm846, %v841
  %907 = vst.msk [vmem:[#allocation2 + $0x1e0] sm:$0xff] %vm846, %v842
  %908 = vst.msk [vmem:[#allocation2 + $0x1e8] sm:$0xff] %vm846, %v843
  %909 = vst.msk [vmem:[#allocation2 + $0x1f0] sm:$0xff] %vm846, %v844
  %910 = vst.msk [vmem:[#allocation2 + $0x1f8] sm:$0xff] %vm846, %v845
  // Predicated region
  $region18: #{matmul_bias.1} parent=0 // pred_check
    %p911 = pneg %p15
  $region19: #{matmul_bias.1} parent=0 // pred_check_branch
    %913 = sbr.rel (%p911) target = $region21
  $region20: #{matmul_bias.1} parent=0 // pred_region
    %v914 = vld [vmem:[#allocation2] sm:$0xff]
    %v915 = vld [vmem:[#allocation2 + $0x8] sm:$0xff]
    %v916 = vld [vmem:[#allocation2 + $0x10] sm:$0xff]
    %v917 = vld [vmem:[#allocation2 + $0x18] sm:$0xff]
    %v918 = vld [vmem:[#allocation2 + $0x20] sm:$0xff]
    %v919 = vld [vmem:[#allocation2 + $0x28] sm:$0xff]
    %v920 = vld [vmem:[#allocation2 + $0x30] sm:$0xff]
    %v921 = vld [vmem:[#allocation2 + $0x38] sm:$0xff]
    %v922 = vld [vmem:[#allocation2 + $0x40] sm:$0xff]
    %v923 = vld [vmem:[#allocation2 + $0x48] sm:$0xff]
    %v924 = vld [vmem:[#allocation2 + $0x50] sm:$0xff]
    %v925 = vld [vmem:[#allocation2 + $0x58] sm:$0xff]
    %v926 = vld [vmem:[#allocation2 + $0x60] sm:$0xff]
    %v927 = vld [vmem:[#allocation2 + $0x68] sm:$0xff]
    %v928 = vld [vmem:[#allocation2 + $0x70] sm:$0xff]
    %v929 = vld [vmem:[#allocation2 + $0x78] sm:$0xff]
    %v930 = vld [vmem:[#allocation2 + $0x80] sm:$0xff]
    %v931 = vld [vmem:[#allocation2 + $0x88] sm:$0xff]
    %v932 = vld [vmem:[#allocation2 + $0x90] sm:$0xff]
    %v933 = vld [vmem:[#allocation2 + $0x98] sm:$0xff]
    %v934 = vld [vmem:[#allocation2 + $0xa0] sm:$0xff]
    %v935 = vld [vmem:[#allocation2 + $0xa8] sm:$0xff]
    %v936 = vld [vmem:[#allocation2 + $0xb0] sm:$0xff]
    %v937 = vld [vmem:[#allocation2 + $0xb8] sm:$0xff]
    %v938 = vld [vmem:[#allocation2 + $0xc0] sm:$0xff]
    %v939 = vld [vmem:[#allocation2 + $0xc8] sm:$0xff]
    %v940 = vld [vmem:[#allocation2 + $0xd0] sm:$0xff]
    %v941 = vld [vmem:[#allocation2 + $0xd8] sm:$0xff]
    %v942 = vld [vmem:[#allocation2 + $0xe0] sm:$0xff]
    %v943 = vld [vmem:[#allocation2 + $0xe8] sm:$0xff]
    %v944 = vld [vmem:[#allocation2 + $0xf0] sm:$0xff]
    %v945 = vld [vmem:[#allocation2 + $0xf8] sm:$0xff]
    %v946 = vld [vmem:[#allocation2 + $0x100] sm:$0xff]
    %v947 = vld [vmem:[#allocation2 + $0x108] sm:$0xff]
    %v948 = vld [vmem:[#allocation2 + $0x110] sm:$0xff]
    %v949 = vld [vmem:[#allocation2 + $0x118] sm:$0xff]
    %v950 = vld [vmem:[#allocation2 + $0x120] sm:$0xff]
    %v951 = vld [vmem:[#allocation2 + $0x128] sm:$0xff]
    %v952 = vld [vmem:[#allocation2 + $0x130] sm:$0xff]
    %v953 = vld [vmem:[#allocation2 + $0x138] sm:$0xff]
    %v954 = vld [vmem:[#allocation2 + $0x140] sm:$0xff]
    %v955 = vld [vmem:[#allocation2 + $0x148] sm:$0xff]
    %v956 = vld [vmem:[#allocation2 + $0x150] sm:$0xff]
    %v957 = vld [vmem:[#allocation2 + $0x158] sm:$0xff]
    %v958 = vld [vmem:[#allocation2 + $0x160] sm:$0xff]
    %v959 = vld [vmem:[#allocation2 + $0x168] sm:$0xff]
    %v960 = vld [vmem:[#allocation2 + $0x170] sm:$0xff]
    %v961 = vld [vmem:[#allocation2 + $0x178] sm:$0xff]
    %v962 = vld [vmem:[#allocation2 + $0x180] sm:$0xff]
    %v963 = vld [vmem:[#allocation2 + $0x188] sm:$0xff]
    %v964 = vld [vmem:[#allocation2 + $0x190] sm:$0xff]
    %v965 = vld [vmem:[#allocation2 + $0x198] sm:$0xff]
    %v966 = vld [vmem:[#allocation2 + $0x1a0] sm:$0xff]
    %v967 = vld [vmem:[#allocation2 + $0x1a8] sm:$0xff]
    %v968 = vld [vmem:[#allocation2 + $0x1b0] sm:$0xff]
    %v969 = vld [vmem:[#allocation2 + $0x1b8] sm:$0xff]
    %v970 = vld [vmem:[#allocation2 + $0x1c0] sm:$0xff]
    %v971 = vld [vmem:[#allocation2 + $0x1c8] sm:$0xff]
    %v972 = vld [vmem:[#allocation2 + $0x1d0] sm:$0xff]
    %v973 = vld [vmem:[#allocation2 + $0x1d8] sm:$0xff]
    %v974 = vld [vmem:[#allocation2 + $0x1e0] sm:$0xff]
    %v975 = vld [vmem:[#allocation2 + $0x1e8] sm:$0xff]
    %v976 = vld [vmem:[#allocation2 + $0x1f0] sm:$0xff]
    %v977 = vld [vmem:[#allocation2 + $0x1f8] sm:$0xff]
    %v978 = vld [vmem:[%s2] sm:$0x1]
    %v980 = vlaneseq
    %v981 = vshrl.u32 %v980, 7
    %v982 = vsub.s32 0, %v981
    %v983 = vrot.slane %v978, %v982
    %v985 = vadd.f32 %v914, %v983
    %v986 = vadd.f32 %v915, %v983
    %v987 = vadd.f32 %v916, %v983
    %v988 = vadd.f32 %v917, %v983
    %v989 = vadd.f32 %v918, %v983
    %v990 = vadd.f32 %v919, %v983
    %v991 = vadd.f32 %v920, %v983
    %v992 = vadd.f32 %v921, %v983
    %v993 = vadd.f32 %v922, %v983
    %v994 = vadd.f32 %v923, %v983
    %v995 = vadd.f32 %v924, %v983
    %v996 = vadd.f32 %v925, %v983
    %v997 = vadd.f32 %v926, %v983
    %v998 = vadd.f32 %v927, %v983
    %v999 = vadd.f32 %v928, %v983
    %v1000 = vadd.f32 %v929, %v983
    %v1001 = vadd.f32 %v930, %v983
    %v1002 = vadd.f32 %v931, %v983
    %v1003 = vadd.f32 %v932, %v983
    %v1004 = vadd.f32 %v933, %v983
    %v1005 = vadd.f32 %v934, %v983
    %v1006 = vadd.f32 %v935, %v983
    %v1007 = vadd.f32 %v936, %v983
    %v1008 = vadd.f32 %v937, %v983
    %v1009 = vadd.f32 %v938, %v983
    %v1010 = vadd.f32 %v939, %v983
    %v1011 = vadd.f32 %v940, %v983
    %v1012 = vadd.f32 %v941, %v983
    %v1013 = vadd.f32 %v942, %v983
    %v1014 = vadd.f32 %v943, %v983
    %v1015 = vadd.f32 %v944, %v983
    %v1016 = vadd.f32 %v945, %v983
    %v1017 = vadd.f32 %v946, %v983
    %v1018 = vadd.f32 %v947, %v983
    %v1019 = vadd.f32 %v948, %v983
    %v1020 = vadd.f32 %v949, %v983
    %v1021 = vadd.f32 %v950, %v983
    %v1022 = vadd.f32 %v951, %v983
    %v1023 = vadd.f32 %v952, %v983
    %v1024 = vadd.f32 %v953, %v983
    %v1025 = vadd.f32 %v954, %v983
    %v1026 = vadd.f32 %v955, %v983
    %v1027 = vadd.f32 %v956, %v983
    %v1028 = vadd.f32 %v957, %v983
    %v1029 = vadd.f32 %v958, %v983
    %v1030 = vadd.f32 %v959, %v983
    %v1031 = vadd.f32 %v960, %v983
    %v1032 = vadd.f32 %v961, %v983
    %v1033 = vadd.f32 %v962, %v983
    %v1034 = vadd.f32 %v963, %v983
    %v1035 = vadd.f32 %v964, %v983
    %v1036 = vadd.f32 %v965, %v983
    %v1037 = vadd.f32 %v966, %v983
    %v1038 = vadd.f32 %v967, %v983
    %v1039 = vadd.f32 %v968, %v983
    %v1040 = vadd.f32 %v969, %v983
    %v1041 = vadd.f32 %v970, %v983
    %v1042 = vadd.f32 %v971, %v983
    %v1043 = vadd.f32 %v972, %v983
    %v1044 = vadd.f32 %v973, %v983
    %v1045 = vadd.f32 %v974, %v983
    %v1046 = vadd.f32 %v975, %v983
    %v1047 = vadd.f32 %v976, %v983
    %v1048 = vadd.f32 %v977, %v983
    %v1049 = vmax.f32 %v985, 0.0
    %v1050 = vmax.f32 %v986, 0.0
    %v1051 = vmax.f32 %v987, 0.0
    %v1052 = vmax.f32 %v988, 0.0
    %v1053 = vmax.f32 %v989, 0.0
    %v1054 = vmax.f32 %v990, 0.0
    %v1055 = vmax.f32 %v991, 0.0
    %v1056 = vmax.f32 %v992, 0.0
    %v1057 = vmax.f32 %v993, 0.0
    %v1058 = vmax.f32 %v994, 0.0
    %v1059 = vmax.f32 %v995, 0.0
    %v1060 = vmax.f32 %v996, 0.0
    %v1061 = vmax.f32 %v997, 0.0
    %v1062 = vmax.f32 %v998, 0.0
    %v1063 = vmax.f32 %v999, 0.0
    %v1064 = vmax.f32 %v1000, 0.0
    %v1065 = vmax.f32 %v1001, 0.0
    %v1066 = vmax.f32 %v1002, 0.0
    %v1067 = vmax.f32 %v1003, 0.0
    %v1068 = vmax.f32 %v1004, 0.0
    %v1069 = vmax.f32 %v1005, 0.0
    %v1070 = vmax.f32 %v1006, 0.0
    %v1071 = vmax.f32 %v1007, 0.0
    %v1072 = vmax.f32 %v1008, 0.0
    %v1073 = vmax.f32 %v1009, 0.0
    %v1074 = vmax.f32 %v1010, 0.0
    %v1075 = vmax.f32 %v1011, 0.0
    %v1076 = vmax.f32 %v1012, 0.0
    %v1077 = vmax.f32 %v1013, 0.0
    %v1078 = vmax.f32 %v1014, 0.0
    %v1079 = vmax.f32 %v1015, 0.0
    %v1080 = vmax.f32 %v1016, 0.0
    %v1081 = vmax.f32 %v1017, 0.0
    %v1082 = vmax.f32 %v1018, 0.0
    %v1083 = vmax.f32 %v1019, 0.0
    %v1084 = vmax.f32 %v1020, 0.0
    %v1085 = vmax.f32 %v1021, 0.0
    %v1086 = vmax.f32 %v1022, 0.0
    %v1087 = vmax.f32 %v1023, 0.0
    %v1088 = vmax.f32 %v1024, 0.0
    %v1089 = vmax.f32 %v1025, 0.0
    %v1090 = vmax.f32 %v1026, 0.0
    %v1091 = vmax.f32 %v1027, 0.0
    %v1092 = vmax.f32 %v1028, 0.0
    %v1093 = vmax.f32 %v1029, 0.0
    %v1094 = vmax.f32 %v1030, 0.0
    %v1095 = vmax.f32 %v1031, 0.0
    %v1096 = vmax.f32 %v1032, 0.0
    %v1097 = vmax.f32 %v1033, 0.0
    %v1098 = vmax.f32 %v1034, 0.0
    %v1099 = vmax.f32 %v1035, 0.0
    %v1100 = vmax.f32 %v1036, 0.0
    %v1101 = vmax.f32 %v1037, 0.0
    %v1102 = vmax.f32 %v1038, 0.0
    %v1103 = vmax.f32 %v1039, 0.0
    %v1104 = vmax.f32 %v1040, 0.0
    %v1105 = vmax.f32 %v1041, 0.0
    %v1106 = vmax.f32 %v1042, 0.0
    %v1107 = vmax.f32 %v1043, 0.0
    %v1108 = vmax.f32 %v1044, 0.0
    %v1109 = vmax.f32 %v1045, 0.0
    %v1110 = vmax.f32 %v1046, 0.0
    %v1111 = vmax.f32 %v1047, 0.0
    %v1112 = vmax.f32 %v1048, 0.0
    %1113 = vst.msk [vmem:[%s3] sm:$0xff] %vm846, %v1049
    %1114 = vst.msk [vmem:[%s3 + $0x8] sm:$0xff] %vm846, %v1050
    %1115 = vst.msk [vmem:[%s3 + $0x10] sm:$0xff] %vm846, %v1051
    %1116 = vst.msk [vmem:[%s3 + $0x18] sm:$0xff] %vm846, %v1052
    %1117 = vst.msk [vmem:[%s3 + $0x20] sm:$0xff] %vm846, %v1053
    %1118 = vst.msk [vmem:[%s3 + $0x28] sm:$0xff] %vm846, %v1054
    %1119 = vst.msk [vmem:[%s3 + $0x30] sm:$0xff] %vm846, %v1055
    %1120 = vst.msk [vmem:[%s3 + $0x38] sm:$0xff] %vm846, %v1056
    %1121 = vst.msk [vmem:[%s3 + $0x40] sm:$0xff] %vm846, %v1057
    %1122 = vst.msk [vmem:[%s3 + $0x48] sm:$0xff] %vm846, %v1058
    %1123 = vst.msk [vmem:[%s3 + $0x50] sm:$0xff] %vm846, %v1059
    %1124 = vst.msk [vmem:[%s3 + $0x58] sm:$0xff] %vm846, %v1060
    %1125 = vst.msk [vmem:[%s3 + $0x60] sm:$0xff] %vm846, %v1061
    %1126 = vst.msk [vmem:[%s3 + $0x68] sm:$0xff] %vm846, %v1062
    %1127 = vst.msk [vmem:[%s3 + $0x70] sm:$0xff] %vm846, %v1063
    %1128 = vst.msk [vmem:[%s3 + $0x78] sm:$0xff] %vm846, %v1064
    %1129 = vst.msk [vmem:[%s3 + $0x80] sm:$0xff] %vm846, %v1065
    %1130 = vst.msk [vmem:[%s3 + $0x88] sm:$0xff] %vm846, %v1066
    %1131 = vst.msk [vmem:[%s3 + $0x90] sm:$0xff] %vm846, %v1067
    %1132 = vst.msk [vmem:[%s3 + $0x98] sm:$0xff] %vm846, %v1068
    %1133 = vst.msk [vmem:[%s3 + $0xa0] sm:$0xff] %vm846, %v1069
    %1134 = vst.msk [vmem:[%s3 + $0xa8] sm:$0xff] %vm846, %v1070
    %1135 = vst.msk [vmem:[%s3 + $0xb0] sm:$0xff] %vm846, %v1071
    %1136 = vst.msk [vmem:[%s3 + $0xb8] sm:$0xff] %vm846, %v1072
    %1137 = vst.msk [vmem:[%s3 + $0xc0] sm:$0xff] %vm846, %v1073
    %1138 = vst.msk [vmem:[%s3 + $0xc8] sm:$0xff] %vm846, %v1074
    %1139 = vst.msk [vmem:[%s3 + $0xd0] sm:$0xff] %vm846, %v1075
    %1140 = vst.msk [vmem:[%s3 + $0xd8] sm:$0xff] %vm846, %v1076
    %1141 = vst.msk [vmem:[%s3 + $0xe0] sm:$0xff] %vm846, %v1077
    %1142 = vst.msk [vmem:[%s3 + $0xe8] sm:$0xff] %vm846, %v1078
    %1143 = vst.msk [vmem:[%s3 + $0xf0] sm:$0xff] %vm846, %v1079
    %1144 = vst.msk [vmem:[%s3 + $0xf8] sm:$0xff] %vm846, %v1080
    %1145 = vst.msk [vmem:[%s3 + $0x100] sm:$0xff] %vm846, %v1081
    %1146 = vst.msk [vmem:[%s3 + $0x108] sm:$0xff] %vm846, %v1082
    %1147 = vst.msk [vmem:[%s3 + $0x110] sm:$0xff] %vm846, %v1083
    %1148 = vst.msk [vmem:[%s3 + $0x118] sm:$0xff] %vm846, %v1084
    %1149 = vst.msk [vmem:[%s3 + $0x120] sm:$0xff] %vm846, %v1085
    %1150 = vst.msk [vmem:[%s3 + $0x128] sm:$0xff] %vm846, %v1086
    %1151 = vst.msk [vmem:[%s3 + $0x130] sm:$0xff] %vm846, %v1087
    %1152 = vst.msk [vmem:[%s3 + $0x138] sm:$0xff] %vm846, %v1088
    %1153 = vst.msk [vmem:[%s3 + $0x140] sm:$0xff] %vm846, %v1089
    %1154 = vst.msk [vmem:[%s3 + $0x148] sm:$0xff] %vm846, %v1090
    %1155 = vst.msk [vmem:[%s3 + $0x150] sm:$0xff] %vm846, %v1091
    %1156 = vst.msk [vmem:[%s3 + $0x158] sm:$0xff] %vm846, %v1092
    %1157 = vst.msk [vmem:[%s3 + $0x160] sm:$0xff] %vm846, %v1093
    %1158 = vst.msk [vmem:[%s3 + $0x168] sm:$0xff] %vm846, %v1094
    %1159 = vst.msk [vmem:[%s3 + $0x170] sm:$0xff] %vm846, %v1095
    %1160 = vst.msk [vmem:[%s3 + $0x178] sm:$0xff] %vm846, %v1096
    %1161 = vst.msk [vmem:[%s3 + $0x180] sm:$0xff] %vm846, %v1097
    %1162 = vst.msk [vmem:[%s3 + $0x188] sm:$0xff] %vm846, %v1098
    %1163 = vst.msk [vmem:[%s3 + $0x190] sm:$0xff] %vm846, %v1099
    %1164 = vst.msk [vmem:[%s3 + $0x198] sm:$0xff] %vm846, %v1100
    %1165 = vst.msk [vmem:[%s3 + $0x1a0] sm:$0xff] %vm846, %v1101
    %1166 = vst.msk [vmem:[%s3 + $0x1a8] sm:$0xff] %vm846, %v1102
    %1167 = vst.msk [vmem:[%s3 + $0x1b0] sm:$0xff] %vm846, %v1103
    %1168 = vst.msk [vmem:[%s3 + $0x1b8] sm:$0xff] %vm846, %v1104
    %1169 = vst.msk [vmem:[%s3 + $0x1c0] sm:$0xff] %vm846, %v1105
    %1170 = vst.msk [vmem:[%s3 + $0x1c8] sm:$0xff] %vm846, %v1106
    %1171 = vst.msk [vmem:[%s3 + $0x1d0] sm:$0xff] %vm846, %v1107
    %1172 = vst.msk [vmem:[%s3 + $0x1d8] sm:$0xff] %vm846, %v1108
    %1173 = vst.msk [vmem:[%s3 + $0x1e0] sm:$0xff] %vm846, %v1109
    %1174 = vst.msk [vmem:[%s3 + $0x1e8] sm:$0xff] %vm846, %v1110
    %1175 = vst.msk [vmem:[%s3 + $0x1f0] sm:$0xff] %vm846, %v1111
    %1176 = vst.msk [vmem:[%s3 + $0x1f8] sm:$0xff] %vm846, %v1112
  $region21: #{matmul_bias.1} parent=0 // pred_fallthru
    _
  // Predicated region
  $region22: #{matmul_bias.1} parent=0 // pred_check
    _
  $region23: #{matmul_bias.1} parent=0 // pred_check_branch
    %1178 = sbr.rel (0) target = $region25
  $region24: #{matmul_bias.1} parent=0 // pred_region
    _
  $region25: #{matmul_bias.1} parent=0 // pred_fallthru
    _
  // Predicated region
  $region26: #{matmul_bias.1} parent=0 // pred_check
    _
  $region27: #{matmul_bias.1} parent=0 // pred_check_branch
    %1180 = sbr.rel (0) target = $region29
  $region28: #{matmul_bias.1} parent=0 // pred_region
    _
  $region29: #{matmul_bias.1} parent=0 // pred_fallthru
    _

</llo_original>
